<compile_context>
chip_gen: v7x
topology: tpu7x:2x2x1
jax: 0.10.0
libtpu: 0.0.40
codegen_flags: <defaults>
</compile_context>

<pallas_src>
import functools

import jax
import jax.numpy as jnp
from jax.experimental import pallas as pl
from jax.experimental.pallas import tpu as pltpu


def _round_up(x, m):
    return ((x + m - 1) // m) * m


def _choose_unroll(T, Btile, Ip, Op, max_unroll=32, max_bytes=2 << 20):
    """Largest U dividing T such that the x/out slabs stay small in VMEM."""
    per_step = Btile * Ip * 2 + Btile * Op * 4      # bf16 x slab + f32 out slab
    cap = max(1, min(max_unroll, T, max_bytes // max(per_step, 1)))
    for u in range(cap, 0, -1):
        if T % u == 0:
            return u
    return 1


# --------------------------------------------------------------------------
# Kernel: one grid step == U RNN timesteps for one batch block.
# --------------------------------------------------------------------------
def rnn_seq_kernel(x_ref, wih_ref, whh_ref, bh_ref, wio_ref, bo_ref, h0_ref,
                   out_ref, hT_ref, h_scr):
    """
    x_ref   : (U, Btile, Ip) bf16  this block of timesteps, streamed per grid step
    wih_ref : (Ip, Hp)       bf16  W_ih^T (padded), VMEM-resident
    whh_ref : (Hp, Hp)       bf16  W_hh^T (padded), VMEM-resident
    bh_ref  : (1, Hp)        f32   b_ih + b_hh (padded)
    wio_ref : (Hp, Op)       bf16  W_io^T (padded), VMEM-resident
    bo_ref  : (1, Op)        f32   b_io (padded)
    h0_ref  : (Btile, Hp)    f32   initial hidden state (read at t==0 only)
    out_ref : (U, Btile, Op) f32   lane-dense per-step output slab
    hT_ref  : (Btile, Hp)    f32   final hidden state (written on last step only)
    h_scr   : (Btile, Hp)    f32   recurrent state kept in VMEM across the time grid
    """
    t = pl.program_id(1)

    @pl.when(t == 0)
    def _init():
        h_scr[...] = h0_ref[...].astype(jnp.float32)

    U, Btile, _ = x_ref.shape
    Hp = h_scr.shape[1]
    Op = out_ref.shape[2]

    # Resident weights loaded once per grid step.
    wih = wih_ref[...]
    whh = whh_ref[...]
    wio = wio_ref[...]
    # Hoist bias broadcasts out of the unrolled loop (no CSE of broadcast_in_dim).
    bh = jnp.broadcast_to(bh_ref[...], (Btile, Hp))
    bo = jnp.broadcast_to(bo_ref[...], (Btile, Op))

    h = h_scr[...]                                   # f32 recurrent state
    for u in range(U):                               # static unroll over U steps
        x_u = x_ref[u]                               # (Btile, Ip) bf16
        pre = (jnp.dot(x_u, wih, preferred_element_type=jnp.float32)
               + jnp.dot(h.astype(whh.dtype), whh,
                         preferred_element_type=jnp.float32)
               + bh)
        h = jnp.tanh(pre)                            # f32 epilogue (EUP)
        out = jnp.dot(h.astype(wio.dtype), wio,
                      preferred_element_type=jnp.float32) + bo
        out_ref[u] = out.astype(out_ref.dtype)

    h_scr[...] = h

    @pl.when(t == pl.num_programs(1) - 1)
    def _final():
        hT_ref[...] = h.astype(hT_ref.dtype)


# --------------------------------------------------------------------------
# Parameter packing (done ONCE outside the kernel): transpose, pad, cast bf16.
# --------------------------------------------------------------------------
def pack_rnn_params(w_ih, b_ih, w_hh, b_hh, w_io, b_io,
                    weight_dtype=jnp.bfloat16):
    hidden_size, input_size = w_ih.shape
    output_size = w_io.shape[0]
    Ip = _round_up(input_size, 128)
    Hp = _round_up(hidden_size, 128)
    Op = _round_up(output_size, 128)

    wih = jnp.zeros((Ip, Hp), weight_dtype).at[:input_size, :hidden_size].set(
        w_ih.T.astype(weight_dtype))
    whh = jnp.zeros((Hp, Hp), weight_dtype).at[:hidden_size, :hidden_size].set(
        w_hh.T.astype(weight_dtype))
    wio = jnp.zeros((Hp, Op), weight_dtype).at[:hidden_size, :output_size].set(
        w_io.T.astype(weight_dtype))

    bh = jnp.zeros((1, Hp), jnp.float32).at[0, :hidden_size].set(
        (b_ih + b_hh).astype(jnp.float32))
    bo = jnp.zeros((1, Op), jnp.float32).at[0, :output_size].set(
        b_io.astype(jnp.float32))

    sizes = (input_size, hidden_size, output_size, Ip, Hp, Op)
    return (wih, whh, bh, wio, bo), sizes


# --------------------------------------------------------------------------
# Fused sequence forward: xs (T, B, I), h0 (B, H) -> (T, B, O), (B, H)
# --------------------------------------------------------------------------
@functools.partial(jax.jit, static_argnames=("sizes",))
def rnn_forward_sequence(xs, h0, packed, sizes):
    wih, whh, bh, wio, bo = packed
    input_size, hidden_size, output_size, Ip, Hp, Op = sizes
    T, B, _ = xs.shape
    act_dtype = wih.dtype                 # bf16 for the MXU
    out_dtype = jnp.float32

    # Batch padded to 16 (bf16 sublane packing); tile toward the MXU height.
    Bp = _round_up(max(B, 16), 16)
    Btile = Bp if Bp <= 128 else 128
    Bp = _round_up(Bp, Btile)
    U = _choose_unroll(T, Btile, Ip, Op)

    xs_p = jnp.zeros((T, Bp, Ip), act_dtype).at[:, :B, :input_size].set(
        xs.astype(act_dtype))
    h0_p = jnp.zeros((Bp, Hp), jnp.float32).at[:B, :hidden_size].set(
        h0.astype(jnp.float32))

    flops = T * Bp * (2 * Ip * Hp + 2 * Hp * Hp + 2 * Hp * Op)
    bytes_accessed = (xs_p.size * 2
                      + (wih.size + whh.size + wio.size) * 2
                      + (bh.size + bo.size) * 4
                      + h0_p.size * 4
                      + T * Bp * Op * 4 + Bp * Hp * 4)
    cost = pl.CostEstimate(flops=int(flops),
                           transcendentals=int(T * Bp * Hp),
                           bytes_accessed=int(bytes_accessed))

    # Explicit VMEM budget (v7x has 64 MiB physical / 32 MiB default scoped):
    # resident weights + double-buffered x/out slabs + recurrent scratch.
    resident = ((wih.size + whh.size + wio.size) * 2
                + (bh.size + bo.size) * 4 + Btile * Hp * 4)
    streamed = U * Btile * Ip * 2 + U * Btile * Op * 4
    vmem_bytes = 2 * (resident + streamed) + Btile * Hp * 4 + (2 << 20)
    vmem_bytes = int(min(max(vmem_bytes, 4 << 20), 64 << 20))
    # TODO(synk): single-buffer the constant-index weight specs (pl.Buffered(1))
    # once that path is needed for very large hidden sizes on v7x.

    out_p, hT_p = pl.pallas_call(
        rnn_seq_kernel,
        out_shape=(
            jax.ShapeDtypeStruct((T, Bp, Op), out_dtype),
            jax.ShapeDtypeStruct((Bp, Hp), jnp.float32),
        ),
        grid_spec=pltpu.PrefetchScalarGridSpec(
            num_scalar_prefetch=0,
            grid=(Bp // Btile, T // U),
            in_specs=[
                pl.BlockSpec((U, Btile, Ip), lambda b, t: (t, b, 0)),  # x, streamed
                pl.BlockSpec((Ip, Hp), lambda b, t: (0, 0)),           # W_ih^T resident
                pl.BlockSpec((Hp, Hp), lambda b, t: (0, 0)),           # W_hh^T resident
                pl.BlockSpec((1, Hp), lambda b, t: (0, 0)),            # fused hidden bias
                pl.BlockSpec((Hp, Op), lambda b, t: (0, 0)),           # W_io^T resident
                pl.BlockSpec((1, Op), lambda b, t: (0, 0)),            # b_io
                pl.BlockSpec((Btile, Hp), lambda b, t: (b, 0)),        # h0 (read at t==0)
            ],
            out_specs=[
                pl.BlockSpec((U, Btile, Op), lambda b, t: (t, b, 0)),  # per-step outputs
                pl.BlockSpec((Btile, Hp), lambda b, t: (b, 0)),        # final hidden
            ],
            scratch_shapes=[pltpu.VMEM((Btile, Hp), jnp.float32)],     # recurrent state
        ),
        compiler_params=pltpu.CompilerParams(
            dimension_semantics=("parallel", "arbitrary"),  # batch parallel, time serial
            vmem_limit_bytes=vmem_bytes,
        ),
        cost_estimate=cost,
    )(xs_p, wih, whh, bh, wio, bo, h0_p)

    return out_p[:, :B, :output_size], hT_p[:B, :hidden_size]


def rnn_forward(x, h, packed, sizes):
    """Single-step forward matching the PyTorch module: (output, hidden)."""
    out, h_new = rnn_forward_sequence(x[None], h, packed, sizes)
    return out[0], h_new


def init_linear_params(key, in_features, out_features, dtype=jnp.float32):
    """Deterministic init mimicking torch.nn.Linear (uniform +/- 1/sqrt(fan_in))."""
    kw, kb = jax.random.split(key)
    bound = 1.0 / jnp.sqrt(jnp.array(in_features, dtype))
    w = jax.random.uniform(kw, (out_features, in_features), dtype,
                           minval=-bound, maxval=bound)
    b = jax.random.uniform(kb, (out_features,), dtype,
                           minval=-bound, maxval=bound)
    return w, b


if __name__ == "__main__":
    input_size, hidden_size, output_size = 16, 32, 8
    batch, seq_len = 2, 8

    root = jax.random.PRNGKey(0)
    k_x, k_ih, k_hh, k_io = jax.random.split(root, 4)

    xs = jax.random.normal(k_x, (seq_len, batch, input_size), jnp.float32)
    h0 = jnp.zeros((batch, hidden_size), jnp.float32)   # init_hidden() analogue

    w_ih, b_ih = init_linear_params(k_ih, input_size, hidden_size)
    w_hh, b_hh = init_linear_params(k_hh, hidden_size, hidden_size)
    w_io, b_io = init_linear_params(k_io, hidden_size, output_size)

    packed, sizes = pack_rnn_params(w_ih, b_ih, w_hh, b_hh, w_io, b_io)

    # Fused multi-step run (one pallas_call for the whole sequence).
    outs, h_final = rnn_forward_sequence(xs, h0, packed, sizes)
    jax.block_until_ready((outs, h_final))

    # Pure-JAX f32 reference of the same recurrence.
    h_ref = h0
    outs_ref = []
    for t in range(seq_len):
        h_ref = jnp.tanh(xs[t] @ w_ih.T + b_ih + h_ref @ w_hh.T + b_hh)
        outs_ref.append(h_ref @ w_io.T + b_io)
    outs_ref = jnp.stack(outs_ref)

    # bf16-MXU path with f32 accumulation/epilogue -> loosened tolerances.
    assert jnp.allclose(outs, outs_ref, atol=5e-2, rtol=5e-2), "sequence output mismatch"
    assert jnp.allclose(h_final, h_ref, atol=5e-2, rtol=5e-2), "final hidden mismatch"

    # Single-step check == the PyTorch module's forward(input, hidden).
    out1, h1 = rnn_forward(xs[0], h0, packed, sizes)
    h1_ref = jnp.tanh(xs[0] @ w_ih.T + b_ih + h0 @ w_hh.T + b_hh)
    out1_ref = h1_ref @ w_io.T + b_io
    assert jnp.allclose(out1, out1_ref, atol=5e-2, rtol=5e-2), "step output mismatch"
    assert jnp.allclose(h1, h1_ref, atol=5e-2, rtol=5e-2), "step hidden mismatch"

    print("KERNEL_OK")
</pallas_src>

<mosaic_0001>
module attributes {stable_mosaic.version = 11 : i64} {
  func.func @rnn_seq_kernel(%arg0: i32, %arg1: i32, %arg2: memref<8x16x128xbf16, #tpu.memory_space<vmem>>, %arg3: memref<128x128xbf16, #tpu.memory_space<vmem>>, %arg4: memref<128x128xbf16, #tpu.memory_space<vmem>>, %arg5: memref<1x128xf32, #tpu.memory_space<vmem>>, %arg6: memref<128x128xbf16, #tpu.memory_space<vmem>>, %arg7: memref<1x128xf32, #tpu.memory_space<vmem>>, %arg8: memref<16x128xf32, #tpu.memory_space<vmem>>, %arg9: memref<8x16x128xf32, #tpu.memory_space<vmem>>, %arg10: memref<16x128xf32, #tpu.memory_space<vmem>>, %arg11: memref<16x128xf32, #tpu.memory_space<vmem>>) attributes {dimension_semantics = [#tpu.dimension_semantics<parallel>, #tpu.dimension_semantics<arbitrary>], iteration_bounds = array<i64: 1, 1>, scalar_prefetch = 0 : i64, scratch_operands = 1 : i64, tpu.core_type = #tpu.core_type<tc>, window_params = [{transform_indices = @transform_0, window_bounds = array<i64: 8, 16, 128>}, {pipeline_mode = #tpu.pipeline_mode<synchronous>, transform_indices = @transform_1, window_bounds = array<i64: 128, 128>}, {pipeline_mode = #tpu.pipeline_mode<synchronous>, transform_indices = @transform_2, window_bounds = array<i64: 128, 128>}, {pipeline_mode = #tpu.pipeline_mode<synchronous>, transform_indices = @transform_3, window_bounds = array<i64: 1, 128>}, {pipeline_mode = #tpu.pipeline_mode<synchronous>, transform_indices = @transform_4, window_bounds = array<i64: 128, 128>}, {pipeline_mode = #tpu.pipeline_mode<synchronous>, transform_indices = @transform_5, window_bounds = array<i64: 1, 128>}, {transform_indices = @transform_6, window_bounds = array<i64: 16, 128>}, {transform_indices = @transform_7, window_bounds = array<i64: 8, 16, 128>}, {transform_indices = @transform_8, window_bounds = array<i64: 16, 128>}]} {
    %c0_i32 = arith.constant 0 : i32
    %0 = arith.cmpi eq, %arg1, %c0_i32 : i32
    %1 = arith.extui %0 : i1 to i32
    %c0_i32_0 = arith.constant 0 : i32
    %2 = arith.cmpi ne, %1, %c0_i32_0 : i32
    scf.if %2 {
      %c0_80 = arith.constant 0 : index
      %c0_81 = arith.constant 0 : index
      %129 = vector.load %arg8[%c0_80, %c0_81] : memref<16x128xf32, #tpu.memory_space<vmem>>, vector<16x128xf32>
      %c0_82 = arith.constant 0 : index
      %c0_83 = arith.constant 0 : index
      %130 = vector.load %arg11[%c0_82, %c0_83] : memref<16x128xf32, #tpu.memory_space<vmem>>, vector<16x128xf32>
      tpu.vector_store %arg11[%c0_82, %c0_83], %129 {strides = array<i32>} : memref<16x128xf32, #tpu.memory_space<vmem>>, vector<16x128xf32>,
    } else {
    }
    %c0 = arith.constant 0 : index
    %c0_1 = arith.constant 0 : index
    %3 = vector.load %arg3[%c0, %c0_1] : memref<128x128xbf16, #tpu.memory_space<vmem>>, vector<128x128xbf16>
    %c0_2 = arith.constant 0 : index
    %c0_3 = arith.constant 0 : index
    %4 = vector.load %arg4[%c0_2, %c0_3] : memref<128x128xbf16, #tpu.memory_space<vmem>>, vector<128x128xbf16>
    %c0_4 = arith.constant 0 : index
    %c0_5 = arith.constant 0 : index
    %5 = vector.load %arg6[%c0_4, %c0_5] : memref<128x128xbf16, #tpu.memory_space<vmem>>, vector<128x128xbf16>
    %c0_6 = arith.constant 0 : index
    %c0_7 = arith.constant 0 : index
    %6 = vector.load %arg5[%c0_6, %c0_7] : memref<1x128xf32, #tpu.memory_space<vmem>>, vector<1x128xf32>
    %7 = vector.shape_cast %6 : vector<1x128xf32> to vector<1x128xf32>
    %8 = vector.broadcast %7 : vector<1x128xf32> to vector<16x128xf32>
    %c0_8 = arith.constant 0 : index
    %c0_9 = arith.constant 0 : index
    %9 = vector.load %arg7[%c0_8, %c0_9] : memref<1x128xf32, #tpu.memory_space<vmem>>, vector<1x128xf32>
    %10 = vector.shape_cast %9 : vector<1x128xf32> to vector<1x128xf32>
    %11 = vector.broadcast %10 : vector<1x128xf32> to vector<16x128xf32>
    %c0_10 = arith.constant 0 : index
    %c0_11 = arith.constant 0 : index
    %12 = vector.load %arg11[%c0_10, %c0_11] : memref<16x128xf32, #tpu.memory_space<vmem>>, vector<16x128xf32>
    %c0_12 = arith.constant 0 : index
    %c0_13 = arith.constant 0 : index
    %c0_14 = arith.constant 0 : index
    %13 = vector.load %arg2[%c0_12, %c0_13, %c0_14] : memref<8x16x128xbf16, #tpu.memory_space<vmem>>, vector<1x16x128xbf16>
    %14 = vector.shape_cast %13 : vector<1x16x128xbf16> to vector<16x128xbf16>
    %cst = arith.constant dense<0.000000e+00> : vector<16x128xf32>
    %15 = tpu.matmul %14, %3, %cst {dimension_numbers = #tpu.dot_dimension_numbers<[1], [0], [0], [1], [0, 0, 1, 1], [], []>} : vector<16x128xbf16>, vector<128x128xbf16>, vector<16x128xf32> -> vector<16x128xf32>
    %16 = arith.truncf %12 : vector<16x128xf32> to vector<16x128xbf16>
    %cst_15 = arith.constant dense<0.000000e+00> : vector<16x128xf32>
    %17 = tpu.matmul %16, %4, %cst_15 {dimension_numbers = #tpu.dot_dimension_numbers<[1], [0], [0], [1], [0, 0, 1, 1], [], []>} : vector<16x128xbf16>, vector<128x128xbf16>, vector<16x128xf32> -> vector<16x128xf32>
    %18 = arith.addf %15, %17 : vector<16x128xf32>
    %19 = arith.addf %18, %8 : vector<16x128xf32>
    %20 = math.tanh %19 : vector<16x128xf32>
    %21 = arith.truncf %20 : vector<16x128xf32> to vector<16x128xbf16>
    %cst_16 = arith.constant dense<0.000000e+00> : vector<16x128xf32>
    %22 = tpu.matmul %21, %5, %cst_16 {dimension_numbers = #tpu.dot_dimension_numbers<[1], [0], [0], [1], [0, 0, 1, 1], [], []>} : vector<16x128xbf16>, vector<128x128xbf16>, vector<16x128xf32> -> vector<16x128xf32>
    %23 = arith.addf %22, %11 : vector<16x128xf32>
    %c0_17 = arith.constant 0 : index
    %c0_18 = arith.constant 0 : index
    %c0_19 = arith.constant 0 : index
    %24 = vector.load %arg9[%c0_17, %c0_18, %c0_19] : memref<8x16x128xf32, #tpu.memory_space<vmem>>, vector<1x16x128xf32>
    %25 = vector.shape_cast %24 : vector<1x16x128xf32> to vector<16x128xf32>
    %26 = vector.shape_cast %23 : vector<16x128xf32> to vector<1x16x128xf32>
    tpu.vector_store %arg9[%c0_17, %c0_18, %c0_19], %26 {strides = array<i32>} : memref<8x16x128xf32, #tpu.memory_space<vmem>>, vector<1x16x128xf32>,
    %c1 = arith.constant 1 : index
    %c0_20 = arith.constant 0 : index
    %c0_21 = arith.constant 0 : index
    %27 = vector.load %arg2[%c1, %c0_20, %c0_21] : memref<8x16x128xbf16, #tpu.memory_space<vmem>>, vector<1x16x128xbf16>
    %28 = vector.shape_cast %27 : vector<1x16x128xbf16> to vector<16x128xbf16>
    %cst_22 = arith.constant dense<0.000000e+00> : vector<16x128xf32>
    %29 = tpu.matmul %28, %3, %cst_22 {dimension_numbers = #tpu.dot_dimension_numbers<[1], [0], [0], [1], [0, 0, 1, 1], [], []>} : vector<16x128xbf16>, vector<128x128xbf16>, vector<16x128xf32> -> vector<16x128xf32>
    %30 = arith.truncf %20 : vector<16x128xf32> to vector<16x128xbf16>
    %cst_23 = arith.constant dense<0.000000e+00> : vector<16x128xf32>
    %31 = tpu.matmul %30, %4, %cst_23 {dimension_numbers = #tpu.dot_dimension_numbers<[1], [0], [0], [1], [0, 0, 1, 1], [], []>} : vector<16x128xbf16>, vector<128x128xbf16>, vector<16x128xf32> -> vector<16x128xf32>
    %32 = arith.addf %29, %31 : vector<16x128xf32>
    %33 = arith.addf %32, %8 : vector<16x128xf32>
    %34 = math.tanh %33 : vector<16x128xf32>
    %35 = arith.truncf %34 : vector<16x128xf32> to vector<16x128xbf16>
    %cst_24 = arith.constant dense<0.000000e+00> : vector<16x128xf32>
    %36 = tpu.matmul %35, %5, %cst_24 {dimension_numbers = #tpu.dot_dimension_numbers<[1], [0], [0], [1], [0, 0, 1, 1], [], []>} : vector<16x128xbf16>, vector<128x128xbf16>, vector<16x128xf32> -> vector<16x128xf32>
    %37 = arith.addf %36, %11 : vector<16x128xf32>
    %c1_25 = arith.constant 1 : index
    %c0_26 = arith.constant 0 : index
    %c0_27 = arith.constant 0 : index
    %38 = vector.load %arg9[%c1_25, %c0_26, %c0_27] : memref<8x16x128xf32, #tpu.memory_space<vmem>>, vector<1x16x128xf32>
    %39 = vector.shape_cast %38 : vector<1x16x128xf32> to vector<16x128xf32>
    %40 = vector.shape_cast %37 : vector<16x128xf32> to vector<1x16x128xf32>
    tpu.vector_store %arg9[%c1_25, %c0_26, %c0_27], %40 {strides = array<i32>} : memref<8x16x128xf32, #tpu.memory_space<vmem>>, vector<1x16x128xf32>,
    %c2 = arith.constant 2 : index
    %c0_28 = arith.constant 0 : index
    %c0_29 = arith.constant 0 : index
    %41 = vector.load %arg2[%c2, %c0_28, %c0_29] : memref<8x16x128xbf16, #tpu.memory_space<vmem>>, vector<1x16x128xbf16>
    %42 = vector.shape_cast %41 : vector<1x16x128xbf16> to vector<16x128xbf16>
    %cst_30 = arith.constant dense<0.000000e+00> : vector<16x128xf32>
    %43 = tpu.matmul %42, %3, %cst_30 {dimension_numbers = #tpu.dot_dimension_numbers<[1], [0], [0], [1], [0, 0, 1, 1], [], []>} : vector<16x128xbf16>, vector<128x128xbf16>, vector<16x128xf32> -> vector<16x128xf32>
    %44 = arith.truncf %34 : vector<16x128xf32> to vector<16x128xbf16>
    %cst_31 = arith.constant dense<0.000000e+00> : vector<16x128xf32>
    %45 = tpu.matmul %44, %4, %cst_31 {dimension_numbers = #tpu.dot_dimension_numbers<[1], [0], [0], [1], [0, 0, 1, 1], [], []>} : vector<16x128xbf16>, vector<128x128xbf16>, vector<16x128xf32> -> vector<16x128xf32>
    %46 = arith.addf %43, %45 : vector<16x128xf32>
    %47 = arith.addf %46, %8 : vector<16x128xf32>
    %48 = math.tanh %47 : vector<16x128xf32>
    %49 = arith.truncf %48 : vector<16x128xf32> to vector<16x128xbf16>
    %cst_32 = arith.constant dense<0.000000e+00> : vector<16x128xf32>
    %50 = tpu.matmul %49, %5, %cst_32 {dimension_numbers = #tpu.dot_dimension_numbers<[1], [0], [0], [1], [0, 0, 1, 1], [], []>} : vector<16x128xbf16>, vector<128x128xbf16>, vector<16x128xf32> -> vector<16x128xf32>
    %51 = arith.addf %50, %11 : vector<16x128xf32>
    %c2_33 = arith.constant 2 : index
    %c0_34 = arith.constant 0 : index
    %c0_35 = arith.constant 0 : index
    %52 = vector.load %arg9[%c2_33, %c0_34, %c0_35] : memref<8x16x128xf32, #tpu.memory_space<vmem>>, vector<1x16x128xf32>
    %53 = vector.shape_cast %52 : vector<1x16x128xf32> to vector<16x128xf32>
    %54 = vector.shape_cast %51 : vector<16x128xf32> to vector<1x16x128xf32>
    tpu.vector_store %arg9[%c2_33, %c0_34, %c0_35], %54 {strides = array<i32>} : memref<8x16x128xf32, #tpu.memory_space<vmem>>, vector<1x16x128xf32>,
    %c3 = arith.constant 3 : index
    %c0_36 = arith.constant 0 : index
    %c0_37 = arith.constant 0 : index
    %55 = vector.load %arg2[%c3, %c0_36, %c0_37] : memref<8x16x128xbf16, #tpu.memory_space<vmem>>, vector<1x16x128xbf16>
    %56 = vector.shape_cast %55 : vector<1x16x128xbf16> to vector<16x128xbf16>
    %cst_38 = arith.constant dense<0.000000e+00> : vector<16x128xf32>
    %57 = tpu.matmul %56, %3, %cst_38 {dimension_numbers = #tpu.dot_dimension_numbers<[1], [0], [0], [1], [0, 0, 1, 1], [], []>} : vector<16x128xbf16>, vector<128x128xbf16>, vector<16x128xf32> -> vector<16x128xf32>
    %58 = arith.truncf %48 : vector<16x128xf32> to vector<16x128xbf16>
    %cst_39 = arith.constant dense<0.000000e+00> : vector<16x128xf32>
    %59 = tpu.matmul %58, %4, %cst_39 {dimension_numbers = #tpu.dot_dimension_numbers<[1], [0], [0], [1], [0, 0, 1, 1], [], []>} : vector<16x128xbf16>, vector<128x128xbf16>, vector<16x128xf32> -> vector<16x128xf32>
    %60 = arith.addf %57, %59 : vector<16x128xf32>
    %61 = arith.addf %60, %8 : vector<16x128xf32>
    %62 = math.tanh %61 : vector<16x128xf32>
    %63 = arith.truncf %62 : vector<16x128xf32> to vector<16x128xbf16>
    %cst_40 = arith.constant dense<0.000000e+00> : vector<16x128xf32>
    %64 = tpu.matmul %63, %5, %cst_40 {dimension_numbers = #tpu.dot_dimension_numbers<[1], [0], [0], [1], [0, 0, 1, 1], [], []>} : vector<16x128xbf16>, vector<128x128xbf16>, vector<16x128xf32> -> vector<16x128xf32>
    %65 = arith.addf %64, %11 : vector<16x128xf32>
    %c3_41 = arith.constant 3 : index
    %c0_42 = arith.constant 0 : index
    %c0_43 = arith.constant 0 : index
    %66 = vector.load %arg9[%c3_41, %c0_42, %c0_43] : memref<8x16x128xf32, #tpu.memory_space<vmem>>, vector<1x16x128xf32>
    %67 = vector.shape_cast %66 : vector<1x16x128xf32> to vector<16x128xf32>
    %68 = vector.shape_cast %65 : vector<16x128xf32> to vector<1x16x128xf32>
    tpu.vector_store %arg9[%c3_41, %c0_42, %c0_43], %68 {strides = array<i32>} : memref<8x16x128xf32, #tpu.memory_space<vmem>>, vector<1x16x128xf32>,
    %c4 = arith.constant 4 : index
    %c0_44 = arith.constant 0 : index
    %c0_45 = arith.constant 0 : index
    %69 = vector.load %arg2[%c4, %c0_44, %c0_45] : memref<8x16x128xbf16, #tpu.memory_space<vmem>>, vector<1x16x128xbf16>
    %70 = vector.shape_cast %69 : vector<1x16x128xbf16> to vector<16x128xbf16>
    %cst_46 = arith.constant dense<0.000000e+00> : vector<16x128xf32>
    %71 = tpu.matmul %70, %3, %cst_46 {dimension_numbers = #tpu.dot_dimension_numbers<[1], [0], [0], [1], [0, 0, 1, 1], [], []>} : vector<16x128xbf16>, vector<128x128xbf16>, vector<16x128xf32> -> vector<16x128xf32>
    %72 = arith.truncf %62 : vector<16x128xf32> to vector<16x128xbf16>
    %cst_47 = arith.constant dense<0.000000e+00> : vector<16x128xf32>
    %73 = tpu.matmul %72, %4, %cst_47 {dimension_numbers = #tpu.dot_dimension_numbers<[1], [0], [0], [1], [0, 0, 1, 1], [], []>} : vector<16x128xbf16>, vector<128x128xbf16>, vector<16x128xf32> -> vector<16x128xf32>
    %74 = arith.addf %71, %73 : vector<16x128xf32>
    %75 = arith.addf %74, %8 : vector<16x128xf32>
    %76 = math.tanh %75 : vector<16x128xf32>
    %77 = arith.truncf %76 : vector<16x128xf32> to vector<16x128xbf16>
    %cst_48 = arith.constant dense<0.000000e+00> : vector<16x128xf32>
    %78 = tpu.matmul %77, %5, %cst_48 {dimension_numbers = #tpu.dot_dimension_numbers<[1], [0], [0], [1], [0, 0, 1, 1], [], []>} : vector<16x128xbf16>, vector<128x128xbf16>, vector<16x128xf32> -> vector<16x128xf32>
    %79 = arith.addf %78, %11 : vector<16x128xf32>
    %c4_49 = arith.constant 4 : index
    %c0_50 = arith.constant 0 : index
    %c0_51 = arith.constant 0 : index
    %80 = vector.load %arg9[%c4_49, %c0_50, %c0_51] : memref<8x16x128xf32, #tpu.memory_space<vmem>>, vector<1x16x128xf32>
    %81 = vector.shape_cast %80 : vector<1x16x128xf32> to vector<16x128xf32>
    %82 = vector.shape_cast %79 : vector<16x128xf32> to vector<1x16x128xf32>
    tpu.vector_store %arg9[%c4_49, %c0_50, %c0_51], %82 {strides = array<i32>} : memref<8x16x128xf32, #tpu.memory_space<vmem>>, vector<1x16x128xf32>,
    %c5 = arith.constant 5 : index
    %c0_52 = arith.constant 0 : index
    %c0_53 = arith.constant 0 : index
    %83 = vector.load %arg2[%c5, %c0_52, %c0_53] : memref<8x16x128xbf16, #tpu.memory_space<vmem>>, vector<1x16x128xbf16>
    %84 = vector.shape_cast %83 : vector<1x16x128xbf16> to vector<16x128xbf16>
    %cst_54 = arith.constant dense<0.000000e+00> : vector<16x128xf32>
    %85 = tpu.matmul %84, %3, %cst_54 {dimension_numbers = #tpu.dot_dimension_numbers<[1], [0], [0], [1], [0, 0, 1, 1], [], []>} : vector<16x128xbf16>, vector<128x128xbf16>, vector<16x128xf32> -> vector<16x128xf32>
    %86 = arith.truncf %76 : vector<16x128xf32> to vector<16x128xbf16>
    %cst_55 = arith.constant dense<0.000000e+00> : vector<16x128xf32>
    %87 = tpu.matmul %86, %4, %cst_55 {dimension_numbers = #tpu.dot_dimension_numbers<[1], [0], [0], [1], [0, 0, 1, 1], [], []>} : vector<16x128xbf16>, vector<128x128xbf16>, vector<16x128xf32> -> vector<16x128xf32>
    %88 = arith.addf %85, %87 : vector<16x128xf32>
    %89 = arith.addf %88, %8 : vector<16x128xf32>
    %90 = math.tanh %89 : vector<16x128xf32>
    %91 = arith.truncf %90 : vector<16x128xf32> to vector<16x128xbf16>
    %cst_56 = arith.constant dense<0.000000e+00> : vector<16x128xf32>
    %92 = tpu.matmul %91, %5, %cst_56 {dimension_numbers = #tpu.dot_dimension_numbers<[1], [0], [0], [1], [0, 0, 1, 1], [], []>} : vector<16x128xbf16>, vector<128x128xbf16>, vector<16x128xf32> -> vector<16x128xf32>
    %93 = arith.addf %92, %11 : vector<16x128xf32>
    %c5_57 = arith.constant 5 : index
    %c0_58 = arith.constant 0 : index
    %c0_59 = arith.constant 0 : index
    %94 = vector.load %arg9[%c5_57, %c0_58, %c0_59] : memref<8x16x128xf32, #tpu.memory_space<vmem>>, vector<1x16x128xf32>
    %95 = vector.shape_cast %94 : vector<1x16x128xf32> to vector<16x128xf32>
    %96 = vector.shape_cast %93 : vector<16x128xf32> to vector<1x16x128xf32>
    tpu.vector_store %arg9[%c5_57, %c0_58, %c0_59], %96 {strides = array<i32>} : memref<8x16x128xf32, #tpu.memory_space<vmem>>, vector<1x16x128xf32>,
    %c6 = arith.constant 6 : index
    %c0_60 = arith.constant 0 : index
    %c0_61 = arith.constant 0 : index
    %97 = vector.load %arg2[%c6, %c0_60, %c0_61] : memref<8x16x128xbf16, #tpu.memory_space<vmem>>, vector<1x16x128xbf16>
    %98 = vector.shape_cast %97 : vector<1x16x128xbf16> to vector<16x128xbf16>
    %cst_62 = arith.constant dense<0.000000e+00> : vector<16x128xf32>
    %99 = tpu.matmul %98, %3, %cst_62 {dimension_numbers = #tpu.dot_dimension_numbers<[1], [0], [0], [1], [0, 0, 1, 1], [], []>} : vector<16x128xbf16>, vector<128x128xbf16>, vector<16x128xf32> -> vector<16x128xf32>
    %100 = arith.truncf %90 : vector<16x128xf32> to vector<16x128xbf16>
    %cst_63 = arith.constant dense<0.000000e+00> : vector<16x128xf32>
    %101 = tpu.matmul %100, %4, %cst_63 {dimension_numbers = #tpu.dot_dimension_numbers<[1], [0], [0], [1], [0, 0, 1, 1], [], []>} : vector<16x128xbf16>, vector<128x128xbf16>, vector<16x128xf32> -> vector<16x128xf32>
    %102 = arith.addf %99, %101 : vector<16x128xf32>
    %103 = arith.addf %102, %8 : vector<16x128xf32>
    %104 = math.tanh %103 : vector<16x128xf32>
    %105 = arith.truncf %104 : vector<16x128xf32> to vector<16x128xbf16>
    %cst_64 = arith.constant dense<0.000000e+00> : vector<16x128xf32>
    %106 = tpu.matmul %105, %5, %cst_64 {dimension_numbers = #tpu.dot_dimension_numbers<[1], [0], [0], [1], [0, 0, 1, 1], [], []>} : vector<16x128xbf16>, vector<128x128xbf16>, vector<16x128xf32> -> vector<16x128xf32>
    %107 = arith.addf %106, %11 : vector<16x128xf32>
    %c6_65 = arith.constant 6 : index
    %c0_66 = arith.constant 0 : index
    %c0_67 = arith.constant 0 : index
    %108 = vector.load %arg9[%c6_65, %c0_66, %c0_67] : memref<8x16x128xf32, #tpu.memory_space<vmem>>, vector<1x16x128xf32>
    %109 = vector.shape_cast %108 : vector<1x16x128xf32> to vector<16x128xf32>
    %110 = vector.shape_cast %107 : vector<16x128xf32> to vector<1x16x128xf32>
    tpu.vector_store %arg9[%c6_65, %c0_66, %c0_67], %110 {strides = array<i32>} : memref<8x16x128xf32, #tpu.memory_space<vmem>>, vector<1x16x128xf32>,
    %c7 = arith.constant 7 : index
    %c0_68 = arith.constant 0 : index
    %c0_69 = arith.constant 0 : index
    %111 = vector.load %arg2[%c7, %c0_68, %c0_69] : memref<8x16x128xbf16, #tpu.memory_space<vmem>>, vector<1x16x128xbf16>
    %112 = vector.shape_cast %111 : vector<1x16x128xbf16> to vector<16x128xbf16>
    %cst_70 = arith.constant dense<0.000000e+00> : vector<16x128xf32>
    %113 = tpu.matmul %112, %3, %cst_70 {dimension_numbers = #tpu.dot_dimension_numbers<[1], [0], [0], [1], [0, 0, 1, 1], [], []>} : vector<16x128xbf16>, vector<128x128xbf16>, vector<16x128xf32> -> vector<16x128xf32>
    %114 = arith.truncf %104 : vector<16x128xf32> to vector<16x128xbf16>
    %cst_71 = arith.constant dense<0.000000e+00> : vector<16x128xf32>
    %115 = tpu.matmul %114, %4, %cst_71 {dimension_numbers = #tpu.dot_dimension_numbers<[1], [0], [0], [1], [0, 0, 1, 1], [], []>} : vector<16x128xbf16>, vector<128x128xbf16>, vector<16x128xf32> -> vector<16x128xf32>
    %116 = arith.addf %113, %115 : vector<16x128xf32>
    %117 = arith.addf %116, %8 : vector<16x128xf32>
    %118 = math.tanh %117 : vector<16x128xf32>
    %119 = arith.truncf %118 : vector<16x128xf32> to vector<16x128xbf16>
    %cst_72 = arith.constant dense<0.000000e+00> : vector<16x128xf32>
    %120 = tpu.matmul %119, %5, %cst_72 {dimension_numbers = #tpu.dot_dimension_numbers<[1], [0], [0], [1], [0, 0, 1, 1], [], []>} : vector<16x128xbf16>, vector<128x128xbf16>, vector<16x128xf32> -> vector<16x128xf32>
    %121 = arith.addf %120, %11 : vector<16x128xf32>
    %c7_73 = arith.constant 7 : index
    %c0_74 = arith.constant 0 : index
    %c0_75 = arith.constant 0 : index
    %122 = vector.load %arg9[%c7_73, %c0_74, %c0_75] : memref<8x16x128xf32, #tpu.memory_space<vmem>>, vector<1x16x128xf32>
    %123 = vector.shape_cast %122 : vector<1x16x128xf32> to vector<16x128xf32>
    %124 = vector.shape_cast %121 : vector<16x128xf32> to vector<1x16x128xf32>
    tpu.vector_store %arg9[%c7_73, %c0_74, %c0_75], %124 {strides = array<i32>} : memref<8x16x128xf32, #tpu.memory_space<vmem>>, vector<1x16x128xf32>,
    %c0_76 = arith.constant 0 : index
    %c0_77 = arith.constant 0 : index
    %125 = vector.load %arg11[%c0_76, %c0_77] : memref<16x128xf32, #tpu.memory_space<vmem>>, vector<16x128xf32>
    tpu.vector_store %arg11[%c0_76, %c0_77], %118 {strides = array<i32>} : memref<16x128xf32, #tpu.memory_space<vmem>>, vector<16x128xf32>,
    %c0_i32_78 = arith.constant 0 : i32
    %126 = arith.cmpi eq, %arg1, %c0_i32_78 : i32
    %127 = arith.extui %126 : i1 to i32
    %c0_i32_79 = arith.constant 0 : i32
    %128 = arith.cmpi ne, %127, %c0_i32_79 : i32
    scf.if %128 {
      %c0_80 = arith.constant 0 : index
      %c0_81 = arith.constant 0 : index
      %129 = vector.load %arg10[%c0_80, %c0_81] : memref<16x128xf32, #tpu.memory_space<vmem>>, vector<16x128xf32>
      tpu.vector_store %arg10[%c0_80, %c0_81], %118 {strides = array<i32>} : memref<16x128xf32, #tpu.memory_space<vmem>>, vector<16x128xf32>,
    } else {
    }
    return
  }
  func.func @transform_0(%arg0: i32, %arg1: i32) -> (i32, i32, i32) {
    %c0_i32 = arith.constant 0 : i32
    %c0_i32_0 = arith.constant 0 : i32
    return %arg1, %arg0, %c0_i32 : i32, i32, i32
  }
  func.func @transform_1(%arg0: i32, %arg1: i32) -> (i32, i32) {
    %c0_i32 = arith.constant 0 : i32
    %c0_i32_0 = arith.constant 0 : i32
    %c0_i32_1 = arith.constant 0 : i32
    return %c0_i32, %c0_i32_0 : i32, i32
  }
  func.func @transform_2(%arg0: i32, %arg1: i32) -> (i32, i32) {
    %c0_i32 = arith.constant 0 : i32
    %c0_i32_0 = arith.constant 0 : i32
    %c0_i32_1 = arith.constant 0 : i32
    return %c0_i32, %c0_i32_0 : i32, i32
  }
  func.func @transform_3(%arg0: i32, %arg1: i32) -> (i32, i32) {
    %c0_i32 = arith.constant 0 : i32
    %c0_i32_0 = arith.constant 0 : i32
    %c0_i32_1 = arith.constant 0 : i32
    return %c0_i32, %c0_i32_0 : i32, i32
  }
  func.func @transform_4(%arg0: i32, %arg1: i32) -> (i32, i32) {
    %c0_i32 = arith.constant 0 : i32
    %c0_i32_0 = arith.constant 0 : i32
    %c0_i32_1 = arith.constant 0 : i32
    return %c0_i32, %c0_i32_0 : i32, i32
  }
  func.func @transform_5(%arg0: i32, %arg1: i32) -> (i32, i32) {
    %c0_i32 = arith.constant 0 : i32
    %c0_i32_0 = arith.constant 0 : i32
    %c0_i32_1 = arith.constant 0 : i32
    return %c0_i32, %c0_i32_0 : i32, i32
  }
  func.func @transform_6(%arg0: i32, %arg1: i32) -> (i32, i32) {
    %c0_i32 = arith.constant 0 : i32
    %c0_i32_0 = arith.constant 0 : i32
    return %arg0, %c0_i32 : i32, i32
  }
  func.func @transform_7(%arg0: i32, %arg1: i32) -> (i32, i32, i32) {
    %c0_i32 = arith.constant 0 : i32
    %c0_i32_0 = arith.constant 0 : i32
    return %arg1, %arg0, %c0_i32 : i32, i32, i32
  }
  func.func @transform_8(%arg0: i32, %arg1: i32) -> (i32, i32) {
    %c0_i32 = arith.constant 0 : i32
    %c0_i32_0 = arith.constant 0 : i32
    return %arg0, %c0_i32 : i32, i32
  }
}

</mosaic_0001>

<llo_original>
// kernel: rnn_forward_sequence.1
$region0: #{rnn_forward_sequence.1}
  #allocation0 [shape = 'u32[]', space=smem, size = 0x4, offset = 0x4, fixed_abs, tag = 'smem constant byte address 0x4 - core index']
  #allocation1 [shape = 'u32[144,128]{1,0:T(1,128)}', space=vmem, size = 0x12000, scoped, tag = 'internal scratch']
  #allocation2 [shape = 'f32[16,128]{1,0:T(8,128)}', space=vmem, size = 0x2000, scoped, tag = 'scratch operand']
  %s0 = inlined_call_operand.vmem [shape: bf16[8,16,128], index: 0, kind: input, shape index: {}]
  %s1 = inlined_call_operand.vmem [shape: bf16[128,128], index: 1, kind: input, shape index: {}]
  %s2 = inlined_call_operand.hbm [shape: bf16[128,128], index: 2, kind: input, shape index: {}]
  %s3 = inlined_call_operand.vmem [shape: f32[1,128], index: 3, kind: input, shape index: {}]
  %s4 = inlined_call_operand.vmem [shape: bf16[128,128], index: 4, kind: input, shape index: {}]
  %s5 = inlined_call_operand.vmem [shape: f32[1,128], index: 5, kind: input, shape index: {}]
  %s6 = inlined_call_operand.vmem [shape: f32[16,128], index: 6, kind: input, shape index: {}]
  %s7 = inlined_call_operand.vmem [shape: f32[8,16,128], index: 7, kind: output, shape index: {0}]
  %s8 = inlined_call_operand.vmem [shape: f32[16,128], index: 8, kind: output, shape index: {1}]
  %9 = xla_tuple %s7, %s8
  %s10 = sld [smem:[#allocation0]]
  $region58: #{rnn_forward_sequence.1} parent=0
    _
  %s12 = ssub.s32 1, %s10
  %s13 = scalar_select 0, %s12, %s10
  $region1: #{rnn_forward_sequence.1} parent=0
    #allocation3 [shape = 'u8[32768]{0}', space=vmem, size = 0x8000, scoped, tag = 'input window, operand 2, single buffered']
    #allocation4 [shape = 's32[1]{0}', space=sflag, size = 0x4, scoped, tag = 'scoped memory for rnn_forward_sequence.1']
    %14 = vsyncpa [#allocation4], 0
    // Predicated region
    $region2: #{rnn_forward_sequence.1} parent=1 // pred_check
      _
    $region3: #{rnn_forward_sequence.1} parent=1 // pred_check_branch
      %16 = sbr.rel (0) target = $region5
    $region4: #{rnn_forward_sequence.1} parent=1 // pred_region
      _
    $region5: #{rnn_forward_sequence.1} parent=1 // pred_fallthru
      _
    // Predicated region
    $region6: #{rnn_forward_sequence.1} parent=1 // pred_check
      _
    $region7: #{rnn_forward_sequence.1} parent=1 // pred_check_branch
      %18 = sbr.rel (0) target = $region9
    $region8: #{rnn_forward_sequence.1} parent=1 // pred_region
      _
    $region9: #{rnn_forward_sequence.1} parent=1 // pred_fallthru
      _
    // Predicated region
    $region10: #{rnn_forward_sequence.1} parent=1 // pred_check
      _
    $region11: #{rnn_forward_sequence.1} parent=1 // pred_check_branch
      %20 = sbr.rel (0) target = $region13
    $region12: #{rnn_forward_sequence.1} parent=1 // pred_region
      %s22 = ssub.s32 1024, 1024
      %23 = vsyncadd [#allocation4], %s22
      %s24 = sshll.u32 [#allocation3], 4
      %s25 = int_to_ptr.vmem [resolvable:$true] %s24
      %30 = dma.hbm_to_vmem [thread:$0]  %s2, 1024, %s25, [#allocation4], 64, 64, 4
    $region13: #{rnn_forward_sequence.1} parent=1 // pred_fallthru
      _
    // Predicated region
    $region14: #{rnn_forward_sequence.1} parent=1 // pred_check
      _
    $region15: #{rnn_forward_sequence.1} parent=1 // pred_check_branch
      %32 = sbr.rel (0) target = $region17
    $region16: #{rnn_forward_sequence.1} parent=1 // pred_region
      _
    $region17: #{rnn_forward_sequence.1} parent=1 // pred_fallthru
      _
    // Predicated region
    $region18: #{rnn_forward_sequence.1} parent=1 // pred_check
      _
    $region19: #{rnn_forward_sequence.1} parent=1 // pred_check_branch
      %34 = sbr.rel (0) target = $region21
    $region20: #{rnn_forward_sequence.1} parent=1 // pred_region
      _
    $region21: #{rnn_forward_sequence.1} parent=1 // pred_fallthru
      _
    // Predicated region
    $region22: #{rnn_forward_sequence.1} parent=1 // pred_check
      _
    $region23: #{rnn_forward_sequence.1} parent=1 // pred_check_branch
      %36 = sbr.rel (0) target = $region25
    $region24: #{rnn_forward_sequence.1} parent=1 // pred_region
      _
    $region25: #{rnn_forward_sequence.1} parent=1 // pred_fallthru
      _
    // Predicated region
    $region26: #{rnn_forward_sequence.1} parent=1 // pred_check
      _
    $region27: #{rnn_forward_sequence.1} parent=1 // pred_check_branch
      %38 = sbr.rel (0) target = $region29
    $region28: #{rnn_forward_sequence.1} parent=1 // pred_region
      _
    $region29: #{rnn_forward_sequence.1} parent=1 // pred_fallthru
      _
    // Predicated region
    $region30: #{rnn_forward_sequence.1} parent=1 // pred_check
      _
    $region31: #{rnn_forward_sequence.1} parent=1 // pred_check_branch
      %40 = sbr.rel (0) target = $region33
    $region32: #{rnn_forward_sequence.1} parent=1 // pred_region
      %41 = dma.done [#allocation4], 1024
    $region33: #{rnn_forward_sequence.1} parent=1 // pred_fallthru
      _
    %p43 = scmp.eq.s32.totalorder 0, 0
    // Predicated region
    $region34: #{rnn_forward_sequence.1} parent=1 // pred_check
      %p44 = pneg %p43
    $region35: #{rnn_forward_sequence.1} parent=1 // pred_check_branch
      %46 = sbr.rel (%p44) target = $region37
    $region36: #{rnn_forward_sequence.1} parent=1 // pred_region
      %v47 = vld [vmem:[%s6] sm:$0xff]
      %v48 = vld [vmem:[%s6 + $0x8] sm:$0xff]
      %49 = vst [vmem:[#allocation2] sm:$0xff] %v47
      %50 = vst [vmem:[#allocation2 + $0x8] sm:$0xff] %v48
    $region37: #{rnn_forward_sequence.1} parent=1 // pred_fallthru
      _
    %v51 = vld [vmem:[%s1] sm:$0xf]
    %v52 = vld [vmem:[%s1 + $0x4] sm:$0xf]
    %v53 = vld [vmem:[%s1 + $0x8] sm:$0xf]
    %v54 = vld [vmem:[%s1 + $0xc] sm:$0xf]
    %v55 = vld [vmem:[%s1 + $0x10] sm:$0xf]
    %v56 = vld [vmem:[%s1 + $0x14] sm:$0xf]
    %v57 = vld [vmem:[%s1 + $0x18] sm:$0xf]
    %v58 = vld [vmem:[%s1 + $0x1c] sm:$0xf]
    %v59 = vld [vmem:[%s1 + $0x20] sm:$0xf]
    %v60 = vld [vmem:[%s1 + $0x24] sm:$0xf]
    %v61 = vld [vmem:[%s1 + $0x28] sm:$0xf]
    %v62 = vld [vmem:[%s1 + $0x2c] sm:$0xf]
    %v63 = vld [vmem:[%s1 + $0x30] sm:$0xf]
    %v64 = vld [vmem:[%s1 + $0x34] sm:$0xf]
    %v65 = vld [vmem:[%s1 + $0x38] sm:$0xf]
    %v66 = vld [vmem:[%s1 + $0x3c] sm:$0xf]
    %v67 = vld [vmem:[#allocation3] sm:$0xf]
    %v68 = vld [vmem:[#allocation3 + $0x4] sm:$0xf]
    %v69 = vld [vmem:[#allocation3 + $0x8] sm:$0xf]
    %v70 = vld [vmem:[#allocation3 + $0xc] sm:$0xf]
    %v71 = vld [vmem:[#allocation3 + $0x10] sm:$0xf]
    %v72 = vld [vmem:[#allocation3 + $0x14] sm:$0xf]
    %v73 = vld [vmem:[#allocation3 + $0x18] sm:$0xf]
    %v74 = vld [vmem:[#allocation3 + $0x1c] sm:$0xf]
    %v75 = vld [vmem:[#allocation3 + $0x20] sm:$0xf]
    %v76 = vld [vmem:[#allocation3 + $0x24] sm:$0xf]
    %v77 = vld [vmem:[#allocation3 + $0x28] sm:$0xf]
    %v78 = vld [vmem:[#allocation3 + $0x2c] sm:$0xf]
    %v79 = vld [vmem:[#allocation3 + $0x30] sm:$0xf]
    %v80 = vld [vmem:[#allocation3 + $0x34] sm:$0xf]
    %v81 = vld [vmem:[#allocation3 + $0x38] sm:$0xf]
    %v82 = vld [vmem:[#allocation3 + $0x3c] sm:$0xf]
    %v83 = vld [vmem:[%s4] sm:$0xf]
    %v84 = vld [vmem:[%s4 + $0x4] sm:$0xf]
    %v85 = vld [vmem:[%s4 + $0x8] sm:$0xf]
    %v86 = vld [vmem:[%s4 + $0xc] sm:$0xf]
    %v87 = vld [vmem:[%s4 + $0x10] sm:$0xf]
    %v88 = vld [vmem:[%s4 + $0x14] sm:$0xf]
    %v89 = vld [vmem:[%s4 + $0x18] sm:$0xf]
    %v90 = vld [vmem:[%s4 + $0x1c] sm:$0xf]
    %v91 = vld [vmem:[%s4 + $0x20] sm:$0xf]
    %v92 = vld [vmem:[%s4 + $0x24] sm:$0xf]
    %v93 = vld [vmem:[%s4 + $0x28] sm:$0xf]
    %v94 = vld [vmem:[%s4 + $0x2c] sm:$0xf]
    %v95 = vld [vmem:[%s4 + $0x30] sm:$0xf]
    %v96 = vld [vmem:[%s4 + $0x34] sm:$0xf]
    %v97 = vld [vmem:[%s4 + $0x38] sm:$0xf]
    %v98 = vld [vmem:[%s4 + $0x3c] sm:$0xf]
    %v99 = vld [vmem:[%s3] sm:$0x1]
    %v101 = vlaneseq
    %v102 = vshrl.u32 %v101, 7
    %v103 = vsub.s32 0, %v102
    %v104 = vrot.slane %v99, %v103
    %v106 = vld [vmem:[%s5] sm:$0x1]
    %v108 = vlaneseq
    %v109 = vshrl.u32 %v108, 7
    %v110 = vsub.s32 0, %v109
    %v111 = vrot.slane %v106, %v110
    %v113 = vld [vmem:[#allocation2] sm:$0xff]
    %v114 = vld [vmem:[#allocation2 + $0x8] sm:$0xff]
    %v115 = vld [vmem:[%s0] sm:$0xf]
    %v116 = vld [vmem:[%s0 + $0x4] sm:$0xf]
    %v117 = vpack.c.bf16 %v114, %v113
    %v134 = vunpack.c.l.b16 %v67
    %v135 = vunpack.c.l.b16 %v68
    %v136 = vunpack.c.l.b16 %v69
    %v137 = vunpack.c.l.b16 %v70
    %v138 = vunpack.c.l.b16 %v71
    %v139 = vunpack.c.l.b16 %v72
    %v140 = vunpack.c.l.b16 %v73
    %v141 = vunpack.c.l.b16 %v74
    %v142 = vunpack.c.l.b16 %v75
    %v143 = vunpack.c.l.b16 %v76
    %v144 = vunpack.c.l.b16 %v77
    %v145 = vunpack.c.l.b16 %v78
    %v146 = vunpack.c.l.b16 %v79
    %v147 = vunpack.c.l.b16 %v80
    %v148 = vunpack.c.l.b16 %v81
    %v149 = vunpack.c.l.b16 %v82
    %v150 = vpack.c.b16 %v135, %v134
    %v151 = vpack.c.b16 %v137, %v136
    %v152 = vpack.c.b16 %v139, %v138
    %v153 = vpack.c.b16 %v141, %v140
    %v154 = vpack.c.b16 %v143, %v142
    %v155 = vpack.c.b16 %v145, %v144
    %v156 = vpack.c.b16 %v147, %v146
    %v157 = vpack.c.b16 %v149, %v148
    %166 = vmatprep.subr.bf16.mxu0 0
    %167 = vmatpush1.bf16.msra.mxu0 %v150
    %168 = vmatprep.subr.bf16.mxu0 0
    %169 = vmatpush1.bf16.msra.mxu0 %v151
    %170 = vmatprep.subr.bf16.mxu0 0
    %171 = vmatpush1.bf16.msra.mxu0 %v152
    %172 = vmatprep.subr.bf16.mxu0 0
    %173 = vmatpush1.bf16.msra.mxu0 %v153
    %174 = vmatprep.subr.bf16.mxu0 0
    %175 = vmatpush1.bf16.msra.mxu0 %v154
    %176 = vmatprep.subr.bf16.mxu0 0
    %177 = vmatpush1.bf16.msra.mxu0 %v155
    %178 = vmatprep.subr.bf16.mxu0 0
    %179 = vmatpush1.bf16.msra.mxu0 %v156
    %180 = vmatprep.subr.bf16.mxu0 0
    %181 = vmatpush1.bf16.msra.mxu0 %v157
    %182 = vmatprep.subr.bf16.mxu0 0
    %183 = vmatpush1.bf16.msra.mxu0 0
    %184 = vmatprep.subr.bf16.mxu0 0
    %185 = vmatpush1.bf16.msra.mxu0 0
    %186 = vmatprep.subr.bf16.mxu0 0
    %187 = vmatpush1.bf16.msra.mxu0 0
    %188 = vmatprep.subr.bf16.mxu0 0
    %189 = vmatpush1.bf16.msra.mxu0 0
    %190 = vmatprep.subr.bf16.mxu0 0
    %191 = vmatpush1.bf16.msra.mxu0 0
    %192 = vmatprep.subr.bf16.mxu0 0
    %193 = vmatpush1.bf16.msra.mxu0 0
    %194 = vmatprep.subr.bf16.mxu0 0
    %195 = vmatpush1.bf16.msra.mxu0 0
    %196 = vmatprep.subr.bf16.mxu0 0
    %197 = vmatpush1.bf16.msra.mxu0 0
    %198 = vmatprep.mubr.bf16.mxu0 0
    %199 = vmatmul.mubr.bf16.gmra.mrb[0].mxu0 %v117
    %v200 = vpop.f32.mrb[0].mxu0
    %v201 = vadd.f32 0.0, %v200
    %v202 = vpop.f32.mrb[0].mxu0
    %v203 = vpop.f32.mrb[0].mxu0
    %v204 = vadd.f32 0.0, %v203
    %v205 = vpop.f32.mrb[0].mxu0
    %206 = vdwg.mxu0
    %v209 = vunpack.c.l.b16 %v115
    %v210 = vunpack.c.l.b16 %v116
    %v211 = vpack.c.b16 %v210, %v209
    %v229 = vunpack.c.l.b16 %v51
    %v230 = vunpack.c.l.b16 %v52
    %v231 = vunpack.c.l.b16 %v53
    %v232 = vunpack.c.l.b16 %v54
    %v233 = vunpack.c.l.b16 %v55
    %v234 = vunpack.c.l.b16 %v56
    %v235 = vunpack.c.l.b16 %v57
    %v236 = vunpack.c.l.b16 %v58
    %v237 = vunpack.c.l.b16 %v59
    %v238 = vunpack.c.l.b16 %v60
    %v239 = vunpack.c.l.b16 %v61
    %v240 = vunpack.c.l.b16 %v62
    %v241 = vunpack.c.l.b16 %v63
    %v242 = vunpack.c.l.b16 %v64
    %v243 = vunpack.c.l.b16 %v65
    %v244 = vunpack.c.l.b16 %v66
    %v245 = vpack.c.b16 %v230, %v229
    %v246 = vpack.c.b16 %v232, %v231
    %v247 = vpack.c.b16 %v234, %v233
    %v248 = vpack.c.b16 %v236, %v235
    %v249 = vpack.c.b16 %v238, %v237
    %v250 = vpack.c.b16 %v240, %v239
    %v251 = vpack.c.b16 %v242, %v241
    %v252 = vpack.c.b16 %v244, %v243
    %261 = vmatprep.subr.bf16.mxu0 0
    %262 = vmatpush1.bf16.msra.mxu0 %v245
    %263 = vmatprep.subr.bf16.mxu0 0
    %264 = vmatpush1.bf16.msra.mxu0 %v246
    %265 = vmatprep.subr.bf16.mxu0 0
    %266 = vmatpush1.bf16.msra.mxu0 %v247
    %267 = vmatprep.subr.bf16.mxu0 0
    %268 = vmatpush1.bf16.msra.mxu0 %v248
    %269 = vmatprep.subr.bf16.mxu0 0
    %270 = vmatpush1.bf16.msra.mxu0 %v249
    %271 = vmatprep.subr.bf16.mxu0 0
    %272 = vmatpush1.bf16.msra.mxu0 %v250
    %273 = vmatprep.subr.bf16.mxu0 0
    %274 = vmatpush1.bf16.msra.mxu0 %v251
    %275 = vmatprep.subr.bf16.mxu0 0
    %276 = vmatpush1.bf16.msra.mxu0 %v252
    %277 = vmatprep.subr.bf16.mxu0 0
    %278 = vmatpush1.bf16.msra.mxu0 0
    %279 = vmatprep.subr.bf16.mxu0 0
    %280 = vmatpush1.bf16.msra.mxu0 0
    %281 = vmatprep.subr.bf16.mxu0 0
    %282 = vmatpush1.bf16.msra.mxu0 0
    %283 = vmatprep.subr.bf16.mxu0 0
    %284 = vmatpush1.bf16.msra.mxu0 0
    %285 = vmatprep.subr.bf16.mxu0 0
    %286 = vmatpush1.bf16.msra.mxu0 0
    %287 = vmatprep.subr.bf16.mxu0 0
    %288 = vmatpush1.bf16.msra.mxu0 0
    %289 = vmatprep.subr.bf16.mxu0 0
    %290 = vmatpush1.bf16.msra.mxu0 0
    %291 = vmatprep.subr.bf16.mxu0 0
    %292 = vmatpush1.bf16.msra.mxu0 0
    %293 = vmatprep.mubr.bf16.mxu0 0
    %294 = vmatmul.mubr.bf16.gmra.mrb[0].mxu0 %v211
    %v295 = vpop.f32.mrb[0].mxu0
    %v296 = vadd.f32 %v201, %v295
    %v297 = vpop.f32.mrb[0].mxu0
    %v298 = vpop.f32.mrb[0].mxu0
    %v299 = vadd.f32 %v204, %v298
    %v300 = vpop.f32.mrb[0].mxu0
    %301 = vdwg.mxu0
    %v302 = vadd.f32 %v296, %v104
    %v303 = vadd.f32 %v299, %v104
    %v304 = vtanh.pop %v302
    %v305 = vtanh.pop %v303
    %v306 = vpack.c.bf16 %v305, %v304
    %v323 = vunpack.c.l.b16 %v83
    %v324 = vunpack.c.l.b16 %v84
    %v325 = vunpack.c.l.b16 %v85
    %v326 = vunpack.c.l.b16 %v86
    %v327 = vunpack.c.l.b16 %v87
    %v328 = vunpack.c.l.b16 %v88
    %v329 = vunpack.c.l.b16 %v89
    %v330 = vunpack.c.l.b16 %v90
    %v331 = vunpack.c.l.b16 %v91
    %v332 = vunpack.c.l.b16 %v92
    %v333 = vunpack.c.l.b16 %v93
    %v334 = vunpack.c.l.b16 %v94
    %v335 = vunpack.c.l.b16 %v95
    %v336 = vunpack.c.l.b16 %v96
    %v337 = vunpack.c.l.b16 %v97
    %v338 = vunpack.c.l.b16 %v98
    %v339 = vpack.c.b16 %v324, %v323
    %v340 = vpack.c.b16 %v326, %v325
    %v341 = vpack.c.b16 %v328, %v327
    %v342 = vpack.c.b16 %v330, %v329
    %v343 = vpack.c.b16 %v332, %v331
    %v344 = vpack.c.b16 %v334, %v333
    %v345 = vpack.c.b16 %v336, %v335
    %v346 = vpack.c.b16 %v338, %v337
    %355 = vmatprep.subr.bf16.mxu0 0
    %356 = vmatpush1.bf16.msra.mxu0 %v339
    %357 = vmatprep.subr.bf16.mxu0 0
    %358 = vmatpush1.bf16.msra.mxu0 %v340
    %359 = vmatprep.subr.bf16.mxu0 0
    %360 = vmatpush1.bf16.msra.mxu0 %v341
    %361 = vmatprep.subr.bf16.mxu0 0
    %362 = vmatpush1.bf16.msra.mxu0 %v342
    %363 = vmatprep.subr.bf16.mxu0 0
    %364 = vmatpush1.bf16.msra.mxu0 %v343
    %365 = vmatprep.subr.bf16.mxu0 0
    %366 = vmatpush1.bf16.msra.mxu0 %v344
    %367 = vmatprep.subr.bf16.mxu0 0
    %368 = vmatpush1.bf16.msra.mxu0 %v345
    %369 = vmatprep.subr.bf16.mxu0 0
    %370 = vmatpush1.bf16.msra.mxu0 %v346
    %371 = vmatprep.subr.bf16.mxu0 0
    %372 = vmatpush1.bf16.msra.mxu0 0
    %373 = vmatprep.subr.bf16.mxu0 0
    %374 = vmatpush1.bf16.msra.mxu0 0
    %375 = vmatprep.subr.bf16.mxu0 0
    %376 = vmatpush1.bf16.msra.mxu0 0
    %377 = vmatprep.subr.bf16.mxu0 0
    %378 = vmatpush1.bf16.msra.mxu0 0
    %379 = vmatprep.subr.bf16.mxu0 0
    %380 = vmatpush1.bf16.msra.mxu0 0
    %381 = vmatprep.subr.bf16.mxu0 0
    %382 = vmatpush1.bf16.msra.mxu0 0
    %383 = vmatprep.subr.bf16.mxu0 0
    %384 = vmatpush1.bf16.msra.mxu0 0
    %385 = vmatprep.subr.bf16.mxu0 0
    %386 = vmatpush1.bf16.msra.mxu0 0
    %387 = vmatprep.mubr.bf16.mxu0 0
    %388 = vmatmul.mubr.bf16.gmra.mrb[0].mxu0 %v306
    %v389 = vpop.f32.mrb[0].mxu0
    %v390 = vadd.f32 %v111, %v389
    %v391 = vpop.f32.mrb[0].mxu0
    %v392 = vpop.f32.mrb[0].mxu0
    %v393 = vadd.f32 %v111, %v392
    %v394 = vpop.f32.mrb[0].mxu0
    %395 = vdwg.mxu0
    %396 = vst [vmem:[%s7] sm:$0xff] %v390
    %397 = vst [vmem:[%s7 + $0x8] sm:$0xff] %v393
    %s398 = scalar_lea.vmem %s0, 8
    %v399 = vld [vmem:[%s398] sm:$0xf]
    %v400 = vld [vmem:[%s398 + $0x4] sm:$0xf]
    %401 = vmatprep.subr.bf16.mxu0 0
    %402 = vmatpush1.bf16.msra.mxu0 %v150
    %403 = vmatprep.subr.bf16.mxu0 0
    %404 = vmatpush1.bf16.msra.mxu0 %v151
    %405 = vmatprep.subr.bf16.mxu0 0
    %406 = vmatpush1.bf16.msra.mxu0 %v152
    %407 = vmatprep.subr.bf16.mxu0 0
    %408 = vmatpush1.bf16.msra.mxu0 %v153
    %409 = vmatprep.subr.bf16.mxu0 0
    %410 = vmatpush1.bf16.msra.mxu0 %v154
    %411 = vmatprep.subr.bf16.mxu0 0
    %412 = vmatpush1.bf16.msra.mxu0 %v155
    %413 = vmatprep.subr.bf16.mxu0 0
    %414 = vmatpush1.bf16.msra.mxu0 %v156
    %415 = vmatprep.subr.bf16.mxu0 0
    %416 = vmatpush1.bf16.msra.mxu0 %v157
    %417 = vmatprep.subr.bf16.mxu0 0
    %418 = vmatpush1.bf16.msra.mxu0 0
    %419 = vmatprep.subr.bf16.mxu0 0
    %420 = vmatpush1.bf16.msra.mxu0 0
    %421 = vmatprep.subr.bf16.mxu0 0
    %422 = vmatpush1.bf16.msra.mxu0 0
    %423 = vmatprep.subr.bf16.mxu0 0
    %424 = vmatpush1.bf16.msra.mxu0 0
    %425 = vmatprep.subr.bf16.mxu0 0
    %426 = vmatpush1.bf16.msra.mxu0 0
    %427 = vmatprep.subr.bf16.mxu0 0
    %428 = vmatpush1.bf16.msra.mxu0 0
    %429 = vmatprep.subr.bf16.mxu0 0
    %430 = vmatpush1.bf16.msra.mxu0 0
    %431 = vmatprep.subr.bf16.mxu0 0
    %432 = vmatpush1.bf16.msra.mxu0 0
    %433 = vmatprep.mubr.bf16.mxu0 0
    %434 = vmatmul.mubr.bf16.gmra.mrb[0].mxu0 %v306
    %v435 = vpop.f32.mrb[0].mxu0
    %v436 = vadd.f32 0.0, %v435
    %v437 = vpop.f32.mrb[0].mxu0
    %v438 = vpop.f32.mrb[0].mxu0
    %v439 = vadd.f32 0.0, %v438
    %v440 = vpop.f32.mrb[0].mxu0
    %441 = vdwg.mxu0
    %v444 = vunpack.c.l.b16 %v399
    %v445 = vunpack.c.l.b16 %v400
    %v446 = vpack.c.b16 %v445, %v444
    %448 = vmatprep.subr.bf16.mxu0 0
    %449 = vmatpush1.bf16.msra.mxu0 %v245
    %450 = vmatprep.subr.bf16.mxu0 0
    %451 = vmatpush1.bf16.msra.mxu0 %v246
    %452 = vmatprep.subr.bf16.mxu0 0
    %453 = vmatpush1.bf16.msra.mxu0 %v247
    %454 = vmatprep.subr.bf16.mxu0 0
    %455 = vmatpush1.bf16.msra.mxu0 %v248
    %456 = vmatprep.subr.bf16.mxu0 0
    %457 = vmatpush1.bf16.msra.mxu0 %v249
    %458 = vmatprep.subr.bf16.mxu0 0
    %459 = vmatpush1.bf16.msra.mxu0 %v250
    %460 = vmatprep.subr.bf16.mxu0 0
    %461 = vmatpush1.bf16.msra.mxu0 %v251
    %462 = vmatprep.subr.bf16.mxu0 0
    %463 = vmatpush1.bf16.msra.mxu0 %v252
    %464 = vmatprep.subr.bf16.mxu0 0
    %465 = vmatpush1.bf16.msra.mxu0 0
    %466 = vmatprep.subr.bf16.mxu0 0
    %467 = vmatpush1.bf16.msra.mxu0 0
    %468 = vmatprep.subr.bf16.mxu0 0
    %469 = vmatpush1.bf16.msra.mxu0 0
    %470 = vmatprep.subr.bf16.mxu0 0
    %471 = vmatpush1.bf16.msra.mxu0 0
    %472 = vmatprep.subr.bf16.mxu0 0
    %473 = vmatpush1.bf16.msra.mxu0 0
    %474 = vmatprep.subr.bf16.mxu0 0
    %475 = vmatpush1.bf16.msra.mxu0 0
    %476 = vmatprep.subr.bf16.mxu0 0
    %477 = vmatpush1.bf16.msra.mxu0 0
    %478 = vmatprep.subr.bf16.mxu0 0
    %479 = vmatpush1.bf16.msra.mxu0 0
    %480 = vmatprep.mubr.bf16.mxu0 0
    %481 = vmatmul.mubr.bf16.gmra.mrb[0].mxu0 %v446
    %v482 = vpop.f32.mrb[0].mxu0
    %v483 = vadd.f32 %v436, %v482
    %v484 = vpop.f32.mrb[0].mxu0
    %v485 = vpop.f32.mrb[0].mxu0
    %v486 = vadd.f32 %v439, %v485
    %v487 = vpop.f32.mrb[0].mxu0
    %488 = vdwg.mxu0
    %v489 = vadd.f32 %v483, %v104
    %v490 = vadd.f32 %v486, %v104
    %v491 = vtanh.pop %v489
    %v492 = vtanh.pop %v490
    %v493 = vpack.c.bf16 %v492, %v491
    %494 = vmatprep.subr.bf16.mxu0 0
    %495 = vmatpush1.bf16.msra.mxu0 %v339
    %496 = vmatprep.subr.bf16.mxu0 0
    %497 = vmatpush1.bf16.msra.mxu0 %v340
    %498 = vmatprep.subr.bf16.mxu0 0
    %499 = vmatpush1.bf16.msra.mxu0 %v341
    %500 = vmatprep.subr.bf16.mxu0 0
    %501 = vmatpush1.bf16.msra.mxu0 %v342
    %502 = vmatprep.subr.bf16.mxu0 0
    %503 = vmatpush1.bf16.msra.mxu0 %v343
    %504 = vmatprep.subr.bf16.mxu0 0
    %505 = vmatpush1.bf16.msra.mxu0 %v344
    %506 = vmatprep.subr.bf16.mxu0 0
    %507 = vmatpush1.bf16.msra.mxu0 %v345
    %508 = vmatprep.subr.bf16.mxu0 0
    %509 = vmatpush1.bf16.msra.mxu0 %v346
    %510 = vmatprep.subr.bf16.mxu0 0
    %511 = vmatpush1.bf16.msra.mxu0 0
    %512 = vmatprep.subr.bf16.mxu0 0
    %513 = vmatpush1.bf16.msra.mxu0 0
    %514 = vmatprep.subr.bf16.mxu0 0
    %515 = vmatpush1.bf16.msra.mxu0 0
    %516 = vmatprep.subr.bf16.mxu0 0
    %517 = vmatpush1.bf16.msra.mxu0 0
    %518 = vmatprep.subr.bf16.mxu0 0
    %519 = vmatpush1.bf16.msra.mxu0 0
    %520 = vmatprep.subr.bf16.mxu0 0
    %521 = vmatpush1.bf16.msra.mxu0 0
    %522 = vmatprep.subr.bf16.mxu0 0
    %523 = vmatpush1.bf16.msra.mxu0 0
    %524 = vmatprep.subr.bf16.mxu0 0
    %525 = vmatpush1.bf16.msra.mxu0 0
    %526 = vmatprep.mubr.bf16.mxu0 0
    %527 = vmatmul.mubr.bf16.gmra.mrb[0].mxu0 %v493
    %v528 = vpop.f32.mrb[0].mxu0
    %v529 = vadd.f32 %v111, %v528
    %v530 = vpop.f32.mrb[0].mxu0
    %v531 = vpop.f32.mrb[0].mxu0
    %v532 = vadd.f32 %v111, %v531
    %v533 = vpop.f32.mrb[0].mxu0
    %534 = vdwg.mxu0
    %s535 = scalar_lea.vmem %s7, 16
    %536 = vst [vmem:[%s535] sm:$0xff] %v529
    %537 = vst [vmem:[%s535 + $0x8] sm:$0xff] %v532
    %s538 = scalar_lea.vmem %s0, 16
    %v539 = vld [vmem:[%s538] sm:$0xf]
    %v540 = vld [vmem:[%s538 + $0x4] sm:$0xf]
    %541 = vmatprep.subr.bf16.mxu0 0
    %542 = vmatpush1.bf16.msra.mxu0 %v150
    %543 = vmatprep.subr.bf16.mxu0 0
    %544 = vmatpush1.bf16.msra.mxu0 %v151
    %545 = vmatprep.subr.bf16.mxu0 0
    %546 = vmatpush1.bf16.msra.mxu0 %v152
    %547 = vmatprep.subr.bf16.mxu0 0
    %548 = vmatpush1.bf16.msra.mxu0 %v153
    %549 = vmatprep.subr.bf16.mxu0 0
    %550 = vmatpush1.bf16.msra.mxu0 %v154
    %551 = vmatprep.subr.bf16.mxu0 0
    %552 = vmatpush1.bf16.msra.mxu0 %v155
    %553 = vmatprep.subr.bf16.mxu0 0
    %554 = vmatpush1.bf16.msra.mxu0 %v156
    %555 = vmatprep.subr.bf16.mxu0 0
    %556 = vmatpush1.bf16.msra.mxu0 %v157
    %557 = vmatprep.subr.bf16.mxu0 0
    %558 = vmatpush1.bf16.msra.mxu0 0
    %559 = vmatprep.subr.bf16.mxu0 0
    %560 = vmatpush1.bf16.msra.mxu0 0
    %561 = vmatprep.subr.bf16.mxu0 0
    %562 = vmatpush1.bf16.msra.mxu0 0
    %563 = vmatprep.subr.bf16.mxu0 0
    %564 = vmatpush1.bf16.msra.mxu0 0
    %565 = vmatprep.subr.bf16.mxu0 0
    %566 = vmatpush1.bf16.msra.mxu0 0
    %567 = vmatprep.subr.bf16.mxu0 0
    %568 = vmatpush1.bf16.msra.mxu0 0
    %569 = vmatprep.subr.bf16.mxu0 0
    %570 = vmatpush1.bf16.msra.mxu0 0
    %571 = vmatprep.subr.bf16.mxu0 0
    %572 = vmatpush1.bf16.msra.mxu0 0
    %573 = vmatprep.mubr.bf16.mxu0 0
    %574 = vmatmul.mubr.bf16.gmra.mrb[0].mxu0 %v493
    %v575 = vpop.f32.mrb[0].mxu0
    %v576 = vadd.f32 0.0, %v575
    %v577 = vpop.f32.mrb[0].mxu0
    %v578 = vpop.f32.mrb[0].mxu0
    %v579 = vadd.f32 0.0, %v578
    %v580 = vpop.f32.mrb[0].mxu0
    %581 = vdwg.mxu0
    %v584 = vunpack.c.l.b16 %v539
    %v585 = vunpack.c.l.b16 %v540
    %v586 = vpack.c.b16 %v585, %v584
    %588 = vmatprep.subr.bf16.mxu0 0
    %589 = vmatpush1.bf16.msra.mxu0 %v245
    %590 = vmatprep.subr.bf16.mxu0 0
    %591 = vmatpush1.bf16.msra.mxu0 %v246
    %592 = vmatprep.subr.bf16.mxu0 0
    %593 = vmatpush1.bf16.msra.mxu0 %v247
    %594 = vmatprep.subr.bf16.mxu0 0
    %595 = vmatpush1.bf16.msra.mxu0 %v248
    %596 = vmatprep.subr.bf16.mxu0 0
    %597 = vmatpush1.bf16.msra.mxu0 %v249
    %598 = vmatprep.subr.bf16.mxu0 0
    %599 = vmatpush1.bf16.msra.mxu0 %v250
    %600 = vmatprep.subr.bf16.mxu0 0
    %601 = vmatpush1.bf16.msra.mxu0 %v251
    %602 = vmatprep.subr.bf16.mxu0 0
    %603 = vmatpush1.bf16.msra.mxu0 %v252
    %604 = vmatprep.subr.bf16.mxu0 0
    %605 = vmatpush1.bf16.msra.mxu0 0
    %606 = vmatprep.subr.bf16.mxu0 0
    %607 = vmatpush1.bf16.msra.mxu0 0
    %608 = vmatprep.subr.bf16.mxu0 0
    %609 = vmatpush1.bf16.msra.mxu0 0
    %610 = vmatprep.subr.bf16.mxu0 0
    %611 = vmatpush1.bf16.msra.mxu0 0
    %612 = vmatprep.subr.bf16.mxu0 0
    %613 = vmatpush1.bf16.msra.mxu0 0
    %614 = vmatprep.subr.bf16.mxu0 0
    %615 = vmatpush1.bf16.msra.mxu0 0
    %616 = vmatprep.subr.bf16.mxu0 0
    %617 = vmatpush1.bf16.msra.mxu0 0
    %618 = vmatprep.subr.bf16.mxu0 0
    %619 = vmatpush1.bf16.msra.mxu0 0
    %620 = vmatprep.mubr.bf16.mxu0 0
    %621 = vmatmul.mubr.bf16.gmra.mrb[0].mxu0 %v586
    %v622 = vpop.f32.mrb[0].mxu0
    %v623 = vadd.f32 %v576, %v622
    %v624 = vpop.f32.mrb[0].mxu0
    %v625 = vpop.f32.mrb[0].mxu0
    %v626 = vadd.f32 %v579, %v625
    %v627 = vpop.f32.mrb[0].mxu0
    %628 = vdwg.mxu0
    %v629 = vadd.f32 %v623, %v104
    %v630 = vadd.f32 %v626, %v104
    %v631 = vtanh.pop %v629
    %v632 = vtanh.pop %v630
    %v633 = vpack.c.bf16 %v632, %v631
    %634 = vmatprep.subr.bf16.mxu0 0
    %635 = vmatpush1.bf16.msra.mxu0 %v339
    %636 = vmatprep.subr.bf16.mxu0 0
    %637 = vmatpush1.bf16.msra.mxu0 %v340
    %638 = vmatprep.subr.bf16.mxu0 0
    %639 = vmatpush1.bf16.msra.mxu0 %v341
    %640 = vmatprep.subr.bf16.mxu0 0
    %641 = vmatpush1.bf16.msra.mxu0 %v342
    %642 = vmatprep.subr.bf16.mxu0 0
    %643 = vmatpush1.bf16.msra.mxu0 %v343
    %644 = vmatprep.subr.bf16.mxu0 0
    %645 = vmatpush1.bf16.msra.mxu0 %v344
    %646 = vmatprep.subr.bf16.mxu0 0
    %647 = vmatpush1.bf16.msra.mxu0 %v345
    %648 = vmatprep.subr.bf16.mxu0 0
    %649 = vmatpush1.bf16.msra.mxu0 %v346
    %650 = vmatprep.subr.bf16.mxu0 0
    %651 = vmatpush1.bf16.msra.mxu0 0
    %652 = vmatprep.subr.bf16.mxu0 0
    %653 = vmatpush1.bf16.msra.mxu0 0
    %654 = vmatprep.subr.bf16.mxu0 0
    %655 = vmatpush1.bf16.msra.mxu0 0
    %656 = vmatprep.subr.bf16.mxu0 0
    %657 = vmatpush1.bf16.msra.mxu0 0
    %658 = vmatprep.subr.bf16.mxu0 0
    %659 = vmatpush1.bf16.msra.mxu0 0
    %660 = vmatprep.subr.bf16.mxu0 0
    %661 = vmatpush1.bf16.msra.mxu0 0
    %662 = vmatprep.subr.bf16.mxu0 0
    %663 = vmatpush1.bf16.msra.mxu0 0
    %664 = vmatprep.subr.bf16.mxu0 0
    %665 = vmatpush1.bf16.msra.mxu0 0
    %666 = vmatprep.mubr.bf16.mxu0 0
    %667 = vmatmul.mubr.bf16.gmra.mrb[0].mxu0 %v633
    %v668 = vpop.f32.mrb[0].mxu0
    %v669 = vadd.f32 %v111, %v668
    %v670 = vpop.f32.mrb[0].mxu0
    %v671 = vpop.f32.mrb[0].mxu0
    %v672 = vadd.f32 %v111, %v671
    %v673 = vpop.f32.mrb[0].mxu0
    %674 = vdwg.mxu0
    %s675 = scalar_lea.vmem %s7, 32
    %676 = vst [vmem:[%s675] sm:$0xff] %v669
    %677 = vst [vmem:[%s675 + $0x8] sm:$0xff] %v672
    %s678 = scalar_lea.vmem %s0, 24
    %v679 = vld [vmem:[%s678] sm:$0xf]
    %v680 = vld [vmem:[%s678 + $0x4] sm:$0xf]
    %681 = vmatprep.subr.bf16.mxu0 0
    %682 = vmatpush1.bf16.msra.mxu0 %v150
    %683 = vmatprep.subr.bf16.mxu0 0
    %684 = vmatpush1.bf16.msra.mxu0 %v151
    %685 = vmatprep.subr.bf16.mxu0 0
    %686 = vmatpush1.bf16.msra.mxu0 %v152
    %687 = vmatprep.subr.bf16.mxu0 0
    %688 = vmatpush1.bf16.msra.mxu0 %v153
    %689 = vmatprep.subr.bf16.mxu0 0
    %690 = vmatpush1.bf16.msra.mxu0 %v154
    %691 = vmatprep.subr.bf16.mxu0 0
    %692 = vmatpush1.bf16.msra.mxu0 %v155
    %693 = vmatprep.subr.bf16.mxu0 0
    %694 = vmatpush1.bf16.msra.mxu0 %v156
    %695 = vmatprep.subr.bf16.mxu0 0
    %696 = vmatpush1.bf16.msra.mxu0 %v157
    %697 = vmatprep.subr.bf16.mxu0 0
    %698 = vmatpush1.bf16.msra.mxu0 0
    %699 = vmatprep.subr.bf16.mxu0 0
    %700 = vmatpush1.bf16.msra.mxu0 0
    %701 = vmatprep.subr.bf16.mxu0 0
    %702 = vmatpush1.bf16.msra.mxu0 0
    %703 = vmatprep.subr.bf16.mxu0 0
    %704 = vmatpush1.bf16.msra.mxu0 0
    %705 = vmatprep.subr.bf16.mxu0 0
    %706 = vmatpush1.bf16.msra.mxu0 0
    %707 = vmatprep.subr.bf16.mxu0 0
    %708 = vmatpush1.bf16.msra.mxu0 0
    %709 = vmatprep.subr.bf16.mxu0 0
    %710 = vmatpush1.bf16.msra.mxu0 0
    %711 = vmatprep.subr.bf16.mxu0 0
    %712 = vmatpush1.bf16.msra.mxu0 0
    %713 = vmatprep.mubr.bf16.mxu0 0
    %714 = vmatmul.mubr.bf16.gmra.mrb[0].mxu0 %v633
    %v715 = vpop.f32.mrb[0].mxu0
    %v716 = vadd.f32 0.0, %v715
    %v717 = vpop.f32.mrb[0].mxu0
    %v718 = vpop.f32.mrb[0].mxu0
    %v719 = vadd.f32 0.0, %v718
    %v720 = vpop.f32.mrb[0].mxu0
    %721 = vdwg.mxu0
    %v724 = vunpack.c.l.b16 %v679
    %v725 = vunpack.c.l.b16 %v680
    %v726 = vpack.c.b16 %v725, %v724
    %728 = vmatprep.subr.bf16.mxu0 0
    %729 = vmatpush1.bf16.msra.mxu0 %v245
    %730 = vmatprep.subr.bf16.mxu0 0
    %731 = vmatpush1.bf16.msra.mxu0 %v246
    %732 = vmatprep.subr.bf16.mxu0 0
    %733 = vmatpush1.bf16.msra.mxu0 %v247
    %734 = vmatprep.subr.bf16.mxu0 0
    %735 = vmatpush1.bf16.msra.mxu0 %v248
    %736 = vmatprep.subr.bf16.mxu0 0
    %737 = vmatpush1.bf16.msra.mxu0 %v249
    %738 = vmatprep.subr.bf16.mxu0 0
    %739 = vmatpush1.bf16.msra.mxu0 %v250
    %740 = vmatprep.subr.bf16.mxu0 0
    %741 = vmatpush1.bf16.msra.mxu0 %v251
    %742 = vmatprep.subr.bf16.mxu0 0
    %743 = vmatpush1.bf16.msra.mxu0 %v252
    %744 = vmatprep.subr.bf16.mxu0 0
    %745 = vmatpush1.bf16.msra.mxu0 0
    %746 = vmatprep.subr.bf16.mxu0 0
    %747 = vmatpush1.bf16.msra.mxu0 0
    %748 = vmatprep.subr.bf16.mxu0 0
    %749 = vmatpush1.bf16.msra.mxu0 0
    %750 = vmatprep.subr.bf16.mxu0 0
    %751 = vmatpush1.bf16.msra.mxu0 0
    %752 = vmatprep.subr.bf16.mxu0 0
    %753 = vmatpush1.bf16.msra.mxu0 0
    %754 = vmatprep.subr.bf16.mxu0 0
    %755 = vmatpush1.bf16.msra.mxu0 0
    %756 = vmatprep.subr.bf16.mxu0 0
    %757 = vmatpush1.bf16.msra.mxu0 0
    %758 = vmatprep.subr.bf16.mxu0 0
    %759 = vmatpush1.bf16.msra.mxu0 0
    %760 = vmatprep.mubr.bf16.mxu0 0
    %761 = vmatmul.mubr.bf16.gmra.mrb[0].mxu0 %v726
    %v762 = vpop.f32.mrb[0].mxu0
    %v763 = vadd.f32 %v716, %v762
    %v764 = vpop.f32.mrb[0].mxu0
    %v765 = vpop.f32.mrb[0].mxu0
    %v766 = vadd.f32 %v719, %v765
    %v767 = vpop.f32.mrb[0].mxu0
    %768 = vdwg.mxu0
    %v769 = vadd.f32 %v763, %v104
    %v770 = vadd.f32 %v766, %v104
    %v771 = vtanh.pop %v769
    %v772 = vtanh.pop %v770
    %v773 = vpack.c.bf16 %v772, %v771
    %774 = vmatprep.subr.bf16.mxu0 0
    %775 = vmatpush1.bf16.msra.mxu0 %v339
    %776 = vmatprep.subr.bf16.mxu0 0
    %777 = vmatpush1.bf16.msra.mxu0 %v340
    %778 = vmatprep.subr.bf16.mxu0 0
    %779 = vmatpush1.bf16.msra.mxu0 %v341
    %780 = vmatprep.subr.bf16.mxu0 0
    %781 = vmatpush1.bf16.msra.mxu0 %v342
    %782 = vmatprep.subr.bf16.mxu0 0
    %783 = vmatpush1.bf16.msra.mxu0 %v343
    %784 = vmatprep.subr.bf16.mxu0 0
    %785 = vmatpush1.bf16.msra.mxu0 %v344
    %786 = vmatprep.subr.bf16.mxu0 0
    %787 = vmatpush1.bf16.msra.mxu0 %v345
    %788 = vmatprep.subr.bf16.mxu0 0
    %789 = vmatpush1.bf16.msra.mxu0 %v346
    %790 = vmatprep.subr.bf16.mxu0 0
    %791 = vmatpush1.bf16.msra.mxu0 0
    %792 = vmatprep.subr.bf16.mxu0 0
    %793 = vmatpush1.bf16.msra.mxu0 0
    %794 = vmatprep.subr.bf16.mxu0 0
    %795 = vmatpush1.bf16.msra.mxu0 0
    %796 = vmatprep.subr.bf16.mxu0 0
    %797 = vmatpush1.bf16.msra.mxu0 0
    %798 = vmatprep.subr.bf16.mxu0 0
    %799 = vmatpush1.bf16.msra.mxu0 0
    %800 = vmatprep.subr.bf16.mxu0 0
    %801 = vmatpush1.bf16.msra.mxu0 0
    %802 = vmatprep.subr.bf16.mxu0 0
    %803 = vmatpush1.bf16.msra.mxu0 0
    %804 = vmatprep.subr.bf16.mxu0 0
    %805 = vmatpush1.bf16.msra.mxu0 0
    %806 = vmatprep.mubr.bf16.mxu0 0
    %807 = vmatmul.mubr.bf16.gmra.mrb[0].mxu0 %v773
    %v808 = vpop.f32.mrb[0].mxu0
    %v809 = vadd.f32 %v111, %v808
    %v810 = vpop.f32.mrb[0].mxu0
    %v811 = vpop.f32.mrb[0].mxu0
    %v812 = vadd.f32 %v111, %v811
    %v813 = vpop.f32.mrb[0].mxu0
    %814 = vdwg.mxu0
    %s815 = scalar_lea.vmem %s7, 48
    %816 = vst [vmem:[%s815] sm:$0xff] %v809
    %817 = vst [vmem:[%s815 + $0x8] sm:$0xff] %v812
    %s818 = scalar_lea.vmem %s0, 32
    %v819 = vld [vmem:[%s818] sm:$0xf]
    %v820 = vld [vmem:[%s818 + $0x4] sm:$0xf]
    %821 = vmatprep.subr.bf16.mxu0 0
    %822 = vmatpush1.bf16.msra.mxu0 %v150
    %823 = vmatprep.subr.bf16.mxu0 0
    %824 = vmatpush1.bf16.msra.mxu0 %v151
    %825 = vmatprep.subr.bf16.mxu0 0
    %826 = vmatpush1.bf16.msra.mxu0 %v152
    %827 = vmatprep.subr.bf16.mxu0 0
    %828 = vmatpush1.bf16.msra.mxu0 %v153
    %829 = vmatprep.subr.bf16.mxu0 0
    %830 = vmatpush1.bf16.msra.mxu0 %v154
    %831 = vmatprep.subr.bf16.mxu0 0
    %832 = vmatpush1.bf16.msra.mxu0 %v155
    %833 = vmatprep.subr.bf16.mxu0 0
    %834 = vmatpush1.bf16.msra.mxu0 %v156
    %835 = vmatprep.subr.bf16.mxu0 0
    %836 = vmatpush1.bf16.msra.mxu0 %v157
    %837 = vmatprep.subr.bf16.mxu0 0
    %838 = vmatpush1.bf16.msra.mxu0 0
    %839 = vmatprep.subr.bf16.mxu0 0
    %840 = vmatpush1.bf16.msra.mxu0 0
    %841 = vmatprep.subr.bf16.mxu0 0
    %842 = vmatpush1.bf16.msra.mxu0 0
    %843 = vmatprep.subr.bf16.mxu0 0
    %844 = vmatpush1.bf16.msra.mxu0 0
    %845 = vmatprep.subr.bf16.mxu0 0
    %846 = vmatpush1.bf16.msra.mxu0 0
    %847 = vmatprep.subr.bf16.mxu0 0
    %848 = vmatpush1.bf16.msra.mxu0 0
    %849 = vmatprep.subr.bf16.mxu0 0
    %850 = vmatpush1.bf16.msra.mxu0 0
    %851 = vmatprep.subr.bf16.mxu0 0
    %852 = vmatpush1.bf16.msra.mxu0 0
    %853 = vmatprep.mubr.bf16.mxu0 0
    %854 = vmatmul.mubr.bf16.gmra.mrb[0].mxu0 %v773
    %v855 = vpop.f32.mrb[0].mxu0
    %v856 = vadd.f32 0.0, %v855
    %v857 = vpop.f32.mrb[0].mxu0
    %v858 = vpop.f32.mrb[0].mxu0
    %v859 = vadd.f32 0.0, %v858
    %v860 = vpop.f32.mrb[0].mxu0
    %861 = vdwg.mxu0
    %v864 = vunpack.c.l.b16 %v819
    %v865 = vunpack.c.l.b16 %v820
    %v866 = vpack.c.b16 %v865, %v864
    %868 = vmatprep.subr.bf16.mxu0 0
    %869 = vmatpush1.bf16.msra.mxu0 %v245
    %870 = vmatprep.subr.bf16.mxu0 0
    %871 = vmatpush1.bf16.msra.mxu0 %v246
    %872 = vmatprep.subr.bf16.mxu0 0
    %873 = vmatpush1.bf16.msra.mxu0 %v247
    %874 = vmatprep.subr.bf16.mxu0 0
    %875 = vmatpush1.bf16.msra.mxu0 %v248
    %876 = vmatprep.subr.bf16.mxu0 0
    %877 = vmatpush1.bf16.msra.mxu0 %v249
    %878 = vmatprep.subr.bf16.mxu0 0
    %879 = vmatpush1.bf16.msra.mxu0 %v250
    %880 = vmatprep.subr.bf16.mxu0 0
    %881 = vmatpush1.bf16.msra.mxu0 %v251
    %882 = vmatprep.subr.bf16.mxu0 0
    %883 = vmatpush1.bf16.msra.mxu0 %v252
    %884 = vmatprep.subr.bf16.mxu0 0
    %885 = vmatpush1.bf16.msra.mxu0 0
    %886 = vmatprep.subr.bf16.mxu0 0
    %887 = vmatpush1.bf16.msra.mxu0 0
    %888 = vmatprep.subr.bf16.mxu0 0
    %889 = vmatpush1.bf16.msra.mxu0 0
    %890 = vmatprep.subr.bf16.mxu0 0
    %891 = vmatpush1.bf16.msra.mxu0 0
    %892 = vmatprep.subr.bf16.mxu0 0
    %893 = vmatpush1.bf16.msra.mxu0 0
    %894 = vmatprep.subr.bf16.mxu0 0
    %895 = vmatpush1.bf16.msra.mxu0 0
    %896 = vmatprep.subr.bf16.mxu0 0
    %897 = vmatpush1.bf16.msra.mxu0 0
    %898 = vmatprep.subr.bf16.mxu0 0
    %899 = vmatpush1.bf16.msra.mxu0 0
    %900 = vmatprep.mubr.bf16.mxu0 0
    %901 = vmatmul.mubr.bf16.gmra.mrb[0].mxu0 %v866
    %v902 = vpop.f32.mrb[0].mxu0
    %v903 = vadd.f32 %v856, %v902
    %v904 = vpop.f32.mrb[0].mxu0
    %v905 = vpop.f32.mrb[0].mxu0
    %v906 = vadd.f32 %v859, %v905
    %v907 = vpop.f32.mrb[0].mxu0
    %908 = vdwg.mxu0
    %v909 = vadd.f32 %v903, %v104
    %v910 = vadd.f32 %v906, %v104
    %v911 = vtanh.pop %v909
    %v912 = vtanh.pop %v910
    %v913 = vpack.c.bf16 %v912, %v911
    %914 = vmatprep.subr.bf16.mxu0 0
    %915 = vmatpush1.bf16.msra.mxu0 %v339
    %916 = vmatprep.subr.bf16.mxu0 0
    %917 = vmatpush1.bf16.msra.mxu0 %v340
    %918 = vmatprep.subr.bf16.mxu0 0
    %919 = vmatpush1.bf16.msra.mxu0 %v341
    %920 = vmatprep.subr.bf16.mxu0 0
    %921 = vmatpush1.bf16.msra.mxu0 %v342
    %922 = vmatprep.subr.bf16.mxu0 0
    %923 = vmatpush1.bf16.msra.mxu0 %v343
    %924 = vmatprep.subr.bf16.mxu0 0
    %925 = vmatpush1.bf16.msra.mxu0 %v344
    %926 = vmatprep.subr.bf16.mxu0 0
    %927 = vmatpush1.bf16.msra.mxu0 %v345
    %928 = vmatprep.subr.bf16.mxu0 0
    %929 = vmatpush1.bf16.msra.mxu0 %v346
    %930 = vmatprep.subr.bf16.mxu0 0
    %931 = vmatpush1.bf16.msra.mxu0 0
    %932 = vmatprep.subr.bf16.mxu0 0
    %933 = vmatpush1.bf16.msra.mxu0 0
    %934 = vmatprep.subr.bf16.mxu0 0
    %935 = vmatpush1.bf16.msra.mxu0 0
    %936 = vmatprep.subr.bf16.mxu0 0
    %937 = vmatpush1.bf16.msra.mxu0 0
    %938 = vmatprep.subr.bf16.mxu0 0
    %939 = vmatpush1.bf16.msra.mxu0 0
    %940 = vmatprep.subr.bf16.mxu0 0
    %941 = vmatpush1.bf16.msra.mxu0 0
    %942 = vmatprep.subr.bf16.mxu0 0
    %943 = vmatpush1.bf16.msra.mxu0 0
    %944 = vmatprep.subr.bf16.mxu0 0
    %945 = vmatpush1.bf16.msra.mxu0 0
    %946 = vmatprep.mubr.bf16.mxu0 0
    %947 = vmatmul.mubr.bf16.gmra.mrb[0].mxu0 %v913
    %v948 = vpop.f32.mrb[0].mxu0
    %v949 = vadd.f32 %v111, %v948
    %v950 = vpop.f32.mrb[0].mxu0
    %v951 = vpop.f32.mrb[0].mxu0
    %v952 = vadd.f32 %v111, %v951
    %v953 = vpop.f32.mrb[0].mxu0
    %954 = vdwg.mxu0
    %s955 = scalar_lea.vmem %s7, 64
    %956 = vst [vmem:[%s955] sm:$0xff] %v949
    %957 = vst [vmem:[%s955 + $0x8] sm:$0xff] %v952
    %s958 = scalar_lea.vmem %s0, 40
    %v959 = vld [vmem:[%s958] sm:$0xf]
    %v960 = vld [vmem:[%s958 + $0x4] sm:$0xf]
    %961 = vmatprep.subr.bf16.mxu0 0
    %962 = vmatpush1.bf16.msra.mxu0 %v150
    %963 = vmatprep.subr.bf16.mxu0 0
    %964 = vmatpush1.bf16.msra.mxu0 %v151
    %965 = vmatprep.subr.bf16.mxu0 0
    %966 = vmatpush1.bf16.msra.mxu0 %v152
    %967 = vmatprep.subr.bf16.mxu0 0
    %968 = vmatpush1.bf16.msra.mxu0 %v153
    %969 = vmatprep.subr.bf16.mxu0 0
    %970 = vmatpush1.bf16.msra.mxu0 %v154
    %971 = vmatprep.subr.bf16.mxu0 0
    %972 = vmatpush1.bf16.msra.mxu0 %v155
    %973 = vmatprep.subr.bf16.mxu0 0
    %974 = vmatpush1.bf16.msra.mxu0 %v156
    %975 = vmatprep.subr.bf16.mxu0 0
    %976 = vmatpush1.bf16.msra.mxu0 %v157
    %977 = vmatprep.subr.bf16.mxu0 0
    %978 = vmatpush1.bf16.msra.mxu0 0
    %979 = vmatprep.subr.bf16.mxu0 0
    %980 = vmatpush1.bf16.msra.mxu0 0
    %981 = vmatprep.subr.bf16.mxu0 0
    %982 = vmatpush1.bf16.msra.mxu0 0
    %983 = vmatprep.subr.bf16.mxu0 0
    %984 = vmatpush1.bf16.msra.mxu0 0
    %985 = vmatprep.subr.bf16.mxu0 0
    %986 = vmatpush1.bf16.msra.mxu0 0
    %987 = vmatprep.subr.bf16.mxu0 0
    %988 = vmatpush1.bf16.msra.mxu0 0
    %989 = vmatprep.subr.bf16.mxu0 0
    %990 = vmatpush1.bf16.msra.mxu0 0
    %991 = vmatprep.subr.bf16.mxu0 0
    %992 = vmatpush1.bf16.msra.mxu0 0
    %993 = vmatprep.mubr.bf16.mxu0 0
    %994 = vmatmul.mubr.bf16.gmra.mrb[0].mxu0 %v913
    %v995 = vpop.f32.mrb[0].mxu0
    %v996 = vadd.f32 0.0, %v995
    %v997 = vpop.f32.mrb[0].mxu0
    %v998 = vpop.f32.mrb[0].mxu0
    %v999 = vadd.f32 0.0, %v998
    %v1000 = vpop.f32.mrb[0].mxu0
    %1001 = vdwg.mxu0
    %v1004 = vunpack.c.l.b16 %v959
    %v1005 = vunpack.c.l.b16 %v960
    %v1006 = vpack.c.b16 %v1005, %v1004
    %1008 = vmatprep.subr.bf16.mxu0 0
    %1009 = vmatpush1.bf16.msra.mxu0 %v245
    %1010 = vmatprep.subr.bf16.mxu0 0
    %1011 = vmatpush1.bf16.msra.mxu0 %v246
    %1012 = vmatprep.subr.bf16.mxu0 0
    %1013 = vmatpush1.bf16.msra.mxu0 %v247
    %1014 = vmatprep.subr.bf16.mxu0 0
    %1015 = vmatpush1.bf16.msra.mxu0 %v248
    %1016 = vmatprep.subr.bf16.mxu0 0
    %1017 = vmatpush1.bf16.msra.mxu0 %v249
    %1018 = vmatprep.subr.bf16.mxu0 0
    %1019 = vmatpush1.bf16.msra.mxu0 %v250
    %1020 = vmatprep.subr.bf16.mxu0 0
    %1021 = vmatpush1.bf16.msra.mxu0 %v251
    %1022 = vmatprep.subr.bf16.mxu0 0
    %1023 = vmatpush1.bf16.msra.mxu0 %v252
    %1024 = vmatprep.subr.bf16.mxu0 0
    %1025 = vmatpush1.bf16.msra.mxu0 0
    %1026 = vmatprep.subr.bf16.mxu0 0
    %1027 = vmatpush1.bf16.msra.mxu0 0
    %1028 = vmatprep.subr.bf16.mxu0 0
    %1029 = vmatpush1.bf16.msra.mxu0 0
    %1030 = vmatprep.subr.bf16.mxu0 0
    %1031 = vmatpush1.bf16.msra.mxu0 0
    %1032 = vmatprep.subr.bf16.mxu0 0
    %1033 = vmatpush1.bf16.msra.mxu0 0
    %1034 = vmatprep.subr.bf16.mxu0 0
    %1035 = vmatpush1.bf16.msra.mxu0 0
    %1036 = vmatprep.subr.bf16.mxu0 0
    %1037 = vmatpush1.bf16.msra.mxu0 0
    %1038 = vmatprep.subr.bf16.mxu0 0
    %1039 = vmatpush1.bf16.msra.mxu0 0
    %1040 = vmatprep.mubr.bf16.mxu0 0
    %1041 = vmatmul.mubr.bf16.gmra.mrb[0].mxu0 %v1006
    %v1042 = vpop.f32.mrb[0].mxu0
    %v1043 = vadd.f32 %v996, %v1042
    %v1044 = vpop.f32.mrb[0].mxu0
    %v1045 = vpop.f32.mrb[0].mxu0
    %v1046 = vadd.f32 %v999, %v1045
    %v1047 = vpop.f32.mrb[0].mxu0
    %1048 = vdwg.mxu0
    %v1049 = vadd.f32 %v1043, %v104
    %v1050 = vadd.f32 %v1046, %v104
    %v1051 = vtanh.pop %v1049
    %v1052 = vtanh.pop %v1050
    %v1053 = vpack.c.bf16 %v1052, %v1051
    %1054 = vmatprep.subr.bf16.mxu0 0
    %1055 = vmatpush1.bf16.msra.mxu0 %v339
    %1056 = vmatprep.subr.bf16.mxu0 0
    %1057 = vmatpush1.bf16.msra.mxu0 %v340
    %1058 = vmatprep.subr.bf16.mxu0 0
    %1059 = vmatpush1.bf16.msra.mxu0 %v341
    %1060 = vmatprep.subr.bf16.mxu0 0
    %1061 = vmatpush1.bf16.msra.mxu0 %v342
    %1062 = vmatprep.subr.bf16.mxu0 0
    %1063 = vmatpush1.bf16.msra.mxu0 %v343
    %1064 = vmatprep.subr.bf16.mxu0 0
    %1065 = vmatpush1.bf16.msra.mxu0 %v344
    %1066 = vmatprep.subr.bf16.mxu0 0
    %1067 = vmatpush1.bf16.msra.mxu0 %v345
    %1068 = vmatprep.subr.bf16.mxu0 0
    %1069 = vmatpush1.bf16.msra.mxu0 %v346
    %1070 = vmatprep.subr.bf16.mxu0 0
    %1071 = vmatpush1.bf16.msra.mxu0 0
    %1072 = vmatprep.subr.bf16.mxu0 0
    %1073 = vmatpush1.bf16.msra.mxu0 0
    %1074 = vmatprep.subr.bf16.mxu0 0
    %1075 = vmatpush1.bf16.msra.mxu0 0
    %1076 = vmatprep.subr.bf16.mxu0 0
    %1077 = vmatpush1.bf16.msra.mxu0 0
    %1078 = vmatprep.subr.bf16.mxu0 0
    %1079 = vmatpush1.bf16.msra.mxu0 0
    %1080 = vmatprep.subr.bf16.mxu0 0
    %1081 = vmatpush1.bf16.msra.mxu0 0
    %1082 = vmatprep.subr.bf16.mxu0 0
    %1083 = vmatpush1.bf16.msra.mxu0 0
    %1084 = vmatprep.subr.bf16.mxu0 0
    %1085 = vmatpush1.bf16.msra.mxu0 0
    %1086 = vmatprep.mubr.bf16.mxu0 0
    %1087 = vmatmul.mubr.bf16.gmra.mrb[0].mxu0 %v1053
    %v1088 = vpop.f32.mrb[0].mxu0
    %v1089 = vadd.f32 %v111, %v1088
    %v1090 = vpop.f32.mrb[0].mxu0
    %v1091 = vpop.f32.mrb[0].mxu0
    %v1092 = vadd.f32 %v111, %v1091
    %v1093 = vpop.f32.mrb[0].mxu0
    %1094 = vdwg.mxu0
    %s1095 = scalar_lea.vmem %s7, 80
    %1096 = vst [vmem:[%s1095] sm:$0xff] %v1089
    %1097 = vst [vmem:[%s1095 + $0x8] sm:$0xff] %v1092
    %s1098 = scalar_lea.vmem %s0, 48
    %v1099 = vld [vmem:[%s1098] sm:$0xf]
    %v1100 = vld [vmem:[%s1098 + $0x4] sm:$0xf]
    %1101 = vmatprep.subr.bf16.mxu0 0
    %1102 = vmatpush1.bf16.msra.mxu0 %v150
    %1103 = vmatprep.subr.bf16.mxu0 0
    %1104 = vmatpush1.bf16.msra.mxu0 %v151
    %1105 = vmatprep.subr.bf16.mxu0 0
    %1106 = vmatpush1.bf16.msra.mxu0 %v152
    %1107 = vmatprep.subr.bf16.mxu0 0
    %1108 = vmatpush1.bf16.msra.mxu0 %v153
    %1109 = vmatprep.subr.bf16.mxu0 0
    %1110 = vmatpush1.bf16.msra.mxu0 %v154
    %1111 = vmatprep.subr.bf16.mxu0 0
    %1112 = vmatpush1.bf16.msra.mxu0 %v155
    %1113 = vmatprep.subr.bf16.mxu0 0
    %1114 = vmatpush1.bf16.msra.mxu0 %v156
    %1115 = vmatprep.subr.bf16.mxu0 0
    %1116 = vmatpush1.bf16.msra.mxu0 %v157
    %1117 = vmatprep.subr.bf16.mxu0 0
    %1118 = vmatpush1.bf16.msra.mxu0 0
    %1119 = vmatprep.subr.bf16.mxu0 0
    %1120 = vmatpush1.bf16.msra.mxu0 0
    %1121 = vmatprep.subr.bf16.mxu0 0
    %1122 = vmatpush1.bf16.msra.mxu0 0
    %1123 = vmatprep.subr.bf16.mxu0 0
    %1124 = vmatpush1.bf16.msra.mxu0 0
    %1125 = vmatprep.subr.bf16.mxu0 0
    %1126 = vmatpush1.bf16.msra.mxu0 0
    %1127 = vmatprep.subr.bf16.mxu0 0
    %1128 = vmatpush1.bf16.msra.mxu0 0
    %1129 = vmatprep.subr.bf16.mxu0 0
    %1130 = vmatpush1.bf16.msra.mxu0 0
    %1131 = vmatprep.subr.bf16.mxu0 0
    %1132 = vmatpush1.bf16.msra.mxu0 0
    %1133 = vmatprep.mubr.bf16.mxu0 0
    %1134 = vmatmul.mubr.bf16.gmra.mrb[0].mxu0 %v1053
    %v1135 = vpop.f32.mrb[0].mxu0
    %v1136 = vadd.f32 0.0, %v1135
    %v1137 = vpop.f32.mrb[0].mxu0
    %v1138 = vpop.f32.mrb[0].mxu0
    %v1139 = vadd.f32 0.0, %v1138
    %v1140 = vpop.f32.mrb[0].mxu0
    %1141 = vdwg.mxu0
    %v1144 = vunpack.c.l.b16 %v1099
    %v1145 = vunpack.c.l.b16 %v1100
    %v1146 = vpack.c.b16 %v1145, %v1144
    %1148 = vmatprep.subr.bf16.mxu0 0
    %1149 = vmatpush1.bf16.msra.mxu0 %v245
    %1150 = vmatprep.subr.bf16.mxu0 0
    %1151 = vmatpush1.bf16.msra.mxu0 %v246
    %1152 = vmatprep.subr.bf16.mxu0 0
    %1153 = vmatpush1.bf16.msra.mxu0 %v247
    %1154 = vmatprep.subr.bf16.mxu0 0
    %1155 = vmatpush1.bf16.msra.mxu0 %v248
    %1156 = vmatprep.subr.bf16.mxu0 0
    %1157 = vmatpush1.bf16.msra.mxu0 %v249
    %1158 = vmatprep.subr.bf16.mxu0 0
    %1159 = vmatpush1.bf16.msra.mxu0 %v250
    %1160 = vmatprep.subr.bf16.mxu0 0
    %1161 = vmatpush1.bf16.msra.mxu0 %v251
    %1162 = vmatprep.subr.bf16.mxu0 0
    %1163 = vmatpush1.bf16.msra.mxu0 %v252
    %1164 = vmatprep.subr.bf16.mxu0 0
    %1165 = vmatpush1.bf16.msra.mxu0 0
    %1166 = vmatprep.subr.bf16.mxu0 0
    %1167 = vmatpush1.bf16.msra.mxu0 0
    %1168 = vmatprep.subr.bf16.mxu0 0
    %1169 = vmatpush1.bf16.msra.mxu0 0
    %1170 = vmatprep.subr.bf16.mxu0 0
    %1171 = vmatpush1.bf16.msra.mxu0 0
    %1172 = vmatprep.subr.bf16.mxu0 0
    %1173 = vmatpush1.bf16.msra.mxu0 0
    %1174 = vmatprep.subr.bf16.mxu0 0
    %1175 = vmatpush1.bf16.msra.mxu0 0
    %1176 = vmatprep.subr.bf16.mxu0 0
    %1177 = vmatpush1.bf16.msra.mxu0 0
    %1178 = vmatprep.subr.bf16.mxu0 0
    %1179 = vmatpush1.bf16.msra.mxu0 0
    %1180 = vmatprep.mubr.bf16.mxu0 0
    %1181 = vmatmul.mubr.bf16.gmra.mrb[0].mxu0 %v1146
    %v1182 = vpop.f32.mrb[0].mxu0
    %v1183 = vadd.f32 %v1136, %v1182
    %v1184 = vpop.f32.mrb[0].mxu0
    %v1185 = vpop.f32.mrb[0].mxu0
    %v1186 = vadd.f32 %v1139, %v1185
    %v1187 = vpop.f32.mrb[0].mxu0
    %1188 = vdwg.mxu0
    %v1189 = vadd.f32 %v1183, %v104
    %v1190 = vadd.f32 %v1186, %v104
    %v1191 = vtanh.pop %v1189
    %v1192 = vtanh.pop %v1190
    %v1193 = vpack.c.bf16 %v1192, %v1191
    %1194 = vmatprep.subr.bf16.mxu0 0
    %1195 = vmatpush1.bf16.msra.mxu0 %v339
    %1196 = vmatprep.subr.bf16.mxu0 0
    %1197 = vmatpush1.bf16.msra.mxu0 %v340
    %1198 = vmatprep.subr.bf16.mxu0 0
    %1199 = vmatpush1.bf16.msra.mxu0 %v341
    %1200 = vmatprep.subr.bf16.mxu0 0
    %1201 = vmatpush1.bf16.msra.mxu0 %v342
    %1202 = vmatprep.subr.bf16.mxu0 0
    %1203 = vmatpush1.bf16.msra.mxu0 %v343
    %1204 = vmatprep.subr.bf16.mxu0 0
    %1205 = vmatpush1.bf16.msra.mxu0 %v344
    %1206 = vmatprep.subr.bf16.mxu0 0
    %1207 = vmatpush1.bf16.msra.mxu0 %v345
    %1208 = vmatprep.subr.bf16.mxu0 0
    %1209 = vmatpush1.bf16.msra.mxu0 %v346
    %1210 = vmatprep.subr.bf16.mxu0 0
    %1211 = vmatpush1.bf16.msra.mxu0 0
    %1212 = vmatprep.subr.bf16.mxu0 0
    %1213 = vmatpush1.bf16.msra.mxu0 0
    %1214 = vmatprep.subr.bf16.mxu0 0
    %1215 = vmatpush1.bf16.msra.mxu0 0
    %1216 = vmatprep.subr.bf16.mxu0 0
    %1217 = vmatpush1.bf16.msra.mxu0 0
    %1218 = vmatprep.subr.bf16.mxu0 0
    %1219 = vmatpush1.bf16.msra.mxu0 0
    %1220 = vmatprep.subr.bf16.mxu0 0
    %1221 = vmatpush1.bf16.msra.mxu0 0
    %1222 = vmatprep.subr.bf16.mxu0 0
    %1223 = vmatpush1.bf16.msra.mxu0 0
    %1224 = vmatprep.subr.bf16.mxu0 0
    %1225 = vmatpush1.bf16.msra.mxu0 0
    %1226 = vmatprep.mubr.bf16.mxu0 0
    %1227 = vmatmul.mubr.bf16.gmra.mrb[0].mxu0 %v1193
    %v1228 = vpop.f32.mrb[0].mxu0
    %v1229 = vadd.f32 %v111, %v1228
    %v1230 = vpop.f32.mrb[0].mxu0
    %v1231 = vpop.f32.mrb[0].mxu0
    %v1232 = vadd.f32 %v111, %v1231
    %v1233 = vpop.f32.mrb[0].mxu0
    %1234 = vdwg.mxu0
    %s1235 = scalar_lea.vmem %s7, 96
    %1236 = vst [vmem:[%s1235] sm:$0xff] %v1229
    %1237 = vst [vmem:[%s1235 + $0x8] sm:$0xff] %v1232
    %s1238 = scalar_lea.vmem %s0, 56
    %v1239 = vld [vmem:[%s1238] sm:$0xf]
    %v1240 = vld [vmem:[%s1238 + $0x4] sm:$0xf]
    %1241 = vmatprep.subr.bf16.mxu0 0
    %1242 = vmatpush1.bf16.msra.mxu0 %v150
    %1243 = vmatprep.subr.bf16.mxu0 0
    %1244 = vmatpush1.bf16.msra.mxu0 %v151
    %1245 = vmatprep.subr.bf16.mxu0 0
    %1246 = vmatpush1.bf16.msra.mxu0 %v152
    %1247 = vmatprep.subr.bf16.mxu0 0
    %1248 = vmatpush1.bf16.msra.mxu0 %v153
    %1249 = vmatprep.subr.bf16.mxu0 0
    %1250 = vmatpush1.bf16.msra.mxu0 %v154
    %1251 = vmatprep.subr.bf16.mxu0 0
    %1252 = vmatpush1.bf16.msra.mxu0 %v155
    %1253 = vmatprep.subr.bf16.mxu0 0
    %1254 = vmatpush1.bf16.msra.mxu0 %v156
    %1255 = vmatprep.subr.bf16.mxu0 0
    %1256 = vmatpush1.bf16.msra.mxu0 %v157
    %1257 = vmatprep.subr.bf16.mxu0 0
    %1258 = vmatpush1.bf16.msra.mxu0 0
    %1259 = vmatprep.subr.bf16.mxu0 0
    %1260 = vmatpush1.bf16.msra.mxu0 0
    %1261 = vmatprep.subr.bf16.mxu0 0
    %1262 = vmatpush1.bf16.msra.mxu0 0
    %1263 = vmatprep.subr.bf16.mxu0 0
    %1264 = vmatpush1.bf16.msra.mxu0 0
    %1265 = vmatprep.subr.bf16.mxu0 0
    %1266 = vmatpush1.bf16.msra.mxu0 0
    %1267 = vmatprep.subr.bf16.mxu0 0
    %1268 = vmatpush1.bf16.msra.mxu0 0
    %1269 = vmatprep.subr.bf16.mxu0 0
    %1270 = vmatpush1.bf16.msra.mxu0 0
    %1271 = vmatprep.subr.bf16.mxu0 0
    %1272 = vmatpush1.bf16.msra.mxu0 0
    %1273 = vmatprep.mubr.bf16.mxu0 0
    %1274 = vmatmul.mubr.bf16.gmra.mrb[0].mxu0 %v1193
    %v1275 = vpop.f32.mrb[0].mxu0
    %v1276 = vadd.f32 0.0, %v1275
    %v1277 = vpop.f32.mrb[0].mxu0
    %v1278 = vpop.f32.mrb[0].mxu0
    %v1279 = vadd.f32 0.0, %v1278
    %v1280 = vpop.f32.mrb[0].mxu0
    %1281 = vdwg.mxu0
    %v1284 = vunpack.c.l.b16 %v1239
    %v1285 = vunpack.c.l.b16 %v1240
    %v1286 = vpack.c.b16 %v1285, %v1284
    %1288 = vmatprep.subr.bf16.mxu0 0
    %1289 = vmatpush1.bf16.msra.mxu0 %v245
    %1290 = vmatprep.subr.bf16.mxu0 0
    %1291 = vmatpush1.bf16.msra.mxu0 %v246
    %1292 = vmatprep.subr.bf16.mxu0 0
    %1293 = vmatpush1.bf16.msra.mxu0 %v247
    %1294 = vmatprep.subr.bf16.mxu0 0
    %1295 = vmatpush1.bf16.msra.mxu0 %v248
    %1296 = vmatprep.subr.bf16.mxu0 0
    %1297 = vmatpush1.bf16.msra.mxu0 %v249
    %1298 = vmatprep.subr.bf16.mxu0 0
    %1299 = vmatpush1.bf16.msra.mxu0 %v250
    %1300 = vmatprep.subr.bf16.mxu0 0
    %1301 = vmatpush1.bf16.msra.mxu0 %v251
    %1302 = vmatprep.subr.bf16.mxu0 0
    %1303 = vmatpush1.bf16.msra.mxu0 %v252
    %1304 = vmatprep.subr.bf16.mxu0 0
    %1305 = vmatpush1.bf16.msra.mxu0 0
    %1306 = vmatprep.subr.bf16.mxu0 0
    %1307 = vmatpush1.bf16.msra.mxu0 0
    %1308 = vmatprep.subr.bf16.mxu0 0
    %1309 = vmatpush1.bf16.msra.mxu0 0
    %1310 = vmatprep.subr.bf16.mxu0 0
    %1311 = vmatpush1.bf16.msra.mxu0 0
    %1312 = vmatprep.subr.bf16.mxu0 0
    %1313 = vmatpush1.bf16.msra.mxu0 0
    %1314 = vmatprep.subr.bf16.mxu0 0
    %1315 = vmatpush1.bf16.msra.mxu0 0
    %1316 = vmatprep.subr.bf16.mxu0 0
    %1317 = vmatpush1.bf16.msra.mxu0 0
    %1318 = vmatprep.subr.bf16.mxu0 0
    %1319 = vmatpush1.bf16.msra.mxu0 0
    %1320 = vmatprep.mubr.bf16.mxu0 0
    %1321 = vmatmul.mubr.bf16.gmra.mrb[0].mxu0 %v1286
    %v1322 = vpop.f32.mrb[0].mxu0
    %v1323 = vadd.f32 %v1276, %v1322
    %v1324 = vpop.f32.mrb[0].mxu0
    %v1325 = vpop.f32.mrb[0].mxu0
    %v1326 = vadd.f32 %v1279, %v1325
    %v1327 = vpop.f32.mrb[0].mxu0
    %1328 = vdwg.mxu0
    %v1329 = vadd.f32 %v1323, %v104
    %v1330 = vadd.f32 %v1326, %v104
    %v1331 = vtanh.pop %v1329
    %v1332 = vtanh.pop %v1330
    %v1333 = vpack.c.bf16 %v1332, %v1331
    %1334 = vmatprep.subr.bf16.mxu0 0
    %1335 = vmatpush1.bf16.msra.mxu0 %v339
    %1336 = vmatprep.subr.bf16.mxu0 0
    %1337 = vmatpush1.bf16.msra.mxu0 %v340
    %1338 = vmatprep.subr.bf16.mxu0 0
    %1339 = vmatpush1.bf16.msra.mxu0 %v341
    %1340 = vmatprep.subr.bf16.mxu0 0
    %1341 = vmatpush1.bf16.msra.mxu0 %v342
    %1342 = vmatprep.subr.bf16.mxu0 0
    %1343 = vmatpush1.bf16.msra.mxu0 %v343
    %1344 = vmatprep.subr.bf16.mxu0 0
    %1345 = vmatpush1.bf16.msra.mxu0 %v344
    %1346 = vmatprep.subr.bf16.mxu0 0
    %1347 = vmatpush1.bf16.msra.mxu0 %v345
    %1348 = vmatprep.subr.bf16.mxu0 0
    %1349 = vmatpush1.bf16.msra.mxu0 %v346
    %1350 = vmatprep.subr.bf16.mxu0 0
    %1351 = vmatpush1.bf16.msra.mxu0 0
    %1352 = vmatprep.subr.bf16.mxu0 0
    %1353 = vmatpush1.bf16.msra.mxu0 0
    %1354 = vmatprep.subr.bf16.mxu0 0
    %1355 = vmatpush1.bf16.msra.mxu0 0
    %1356 = vmatprep.subr.bf16.mxu0 0
    %1357 = vmatpush1.bf16.msra.mxu0 0
    %1358 = vmatprep.subr.bf16.mxu0 0
    %1359 = vmatpush1.bf16.msra.mxu0 0
    %1360 = vmatprep.subr.bf16.mxu0 0
    %1361 = vmatpush1.bf16.msra.mxu0 0
    %1362 = vmatprep.subr.bf16.mxu0 0
    %1363 = vmatpush1.bf16.msra.mxu0 0
    %1364 = vmatprep.subr.bf16.mxu0 0
    %1365 = vmatpush1.bf16.msra.mxu0 0
    %1366 = vmatprep.mubr.bf16.mxu0 0
    %1367 = vmatmul.mubr.bf16.gmra.mrb[0].mxu0 %v1333
    %v1368 = vpop.f32.mrb[0].mxu0
    %v1369 = vadd.f32 %v111, %v1368
    %v1370 = vpop.f32.mrb[0].mxu0
    %v1371 = vpop.f32.mrb[0].mxu0
    %v1372 = vadd.f32 %v111, %v1371
    %v1373 = vpop.f32.mrb[0].mxu0
    %1374 = vdwg.mxu0
    %s1375 = scalar_lea.vmem %s7, 112
    %1376 = vst [vmem:[%s1375] sm:$0xff] %v1369
    %1377 = vst [vmem:[%s1375 + $0x8] sm:$0xff] %v1372
    %1378 = vst [vmem:[#allocation2] sm:$0xff] %v1331
    %1379 = vst [vmem:[#allocation2 + $0x8] sm:$0xff] %v1332
    // Predicated region
    $region38: #{rnn_forward_sequence.1} parent=1 // pred_check
      %p1380 = pneg %p43
    $region39: #{rnn_forward_sequence.1} parent=1 // pred_check_branch
      %1382 = sbr.rel (%p1380) target = $region41
    $region40: #{rnn_forward_sequence.1} parent=1 // pred_region
      %1383 = vst [vmem:[%s8] sm:$0xff] %v1331
      %1384 = vst [vmem:[%s8 + $0x8] sm:$0xff] %v1332
    $region41: #{rnn_forward_sequence.1} parent=1 // pred_fallthru
      _
    // Predicated region
    $region42: #{rnn_forward_sequence.1} parent=1 // pred_check
      _
    $region43: #{rnn_forward_sequence.1} parent=1 // pred_check_branch
      %1386 = sbr.rel (0) target = $region45
    $region44: #{rnn_forward_sequence.1} parent=1 // pred_region
      _
    $region45: #{rnn_forward_sequence.1} parent=1 // pred_fallthru
      _
    // Predicated region
    $region46: #{rnn_forward_sequence.1} parent=1 // pred_check
      _
    $region47: #{rnn_forward_sequence.1} parent=1 // pred_check_branch
      %1388 = sbr.rel (0) target = $region49
    $region48: #{rnn_forward_sequence.1} parent=1 // pred_region
      _
    $region49: #{rnn_forward_sequence.1} parent=1 // pred_fallthru
      _
    // Predicated region
    $region50: #{rnn_forward_sequence.1} parent=1 // pred_check
      _
    $region51: #{rnn_forward_sequence.1} parent=1 // pred_check_branch
      %1390 = sbr.rel (0) target = $region53
    $region52: #{rnn_forward_sequence.1} parent=1 // pred_region
      _
    $region53: #{rnn_forward_sequence.1} parent=1 // pred_fallthru
      _
    // Predicated region
    $region54: #{rnn_forward_sequence.1} parent=1 // pred_check
      _
    $region55: #{rnn_forward_sequence.1} parent=1 // pred_check_branch
      %1392 = sbr.rel (0) target = $region57
    $region56: #{rnn_forward_sequence.1} parent=1 // pred_region
      _
    $region57: #{rnn_forward_sequence.1} parent=1 // pred_fallthru
      _
    %1393 = vsyncpa [#allocation4], 1

</llo_original>
